<compile_context>
chip_gen: v7x
topology: tpu7x:2x2x1
jax: 0.10.0
libtpu: 0.0.40
codegen_flags: <defaults>
</compile_context>

<pallas_src>
import jax
import jax.numpy as jnp
from jax.experimental import pallas as pl
from jax.experimental.pallas import tpu as pltpu


PAD_N = 128  # lane-dense padded output width for the softmax / store


def policy_mlp_kernel(x_ref, w1_ref, b1_ref, w2_ref, b2_ref,
                      w3_ref, b3_ref, w4_ref, b4_ref, o_ref):
    # fc1 + relu  (bf16 MXU operands, f32 accumulation, f32 elementwise)
    h = jnp.dot(x_ref[...], w1_ref[...],
                preferred_element_type=jnp.float32) + b1_ref[...]
    h = jnp.maximum(h, 0.0)

    # fc2 + relu
    h = jnp.dot(h.astype(jnp.bfloat16), w2_ref[...],
                preferred_element_type=jnp.float32) + b2_ref[...]
    h = jnp.maximum(h, 0.0)

    # fc3 + relu
    h = jnp.dot(h.astype(jnp.bfloat16), w3_ref[...],
                preferred_element_type=jnp.float32) + b3_ref[...]
    h = jnp.maximum(h, 0.0)

    # fc4 (output dim pre-padded to 128 lanes; pad bias = -1e30 so exp underflows
    # to exactly 0 in f32 -- pad lanes get ~0 probability)
    logits = jnp.dot(h.astype(jnp.bfloat16), w4_ref[...],
                     preferred_element_type=jnp.float32) + b4_ref[...]

    # softmax(dim=-1) over the 128-wide padded tile (f32 math, bf16 store)
    m = jnp.max(logits, axis=-1, keepdims=True)
    e = jnp.exp(logits - m)
    denom = jnp.sum(e, axis=-1, keepdims=True)
    o_ref[...] = (e * pl.reciprocal(denom, approx=True)).astype(o_ref.dtype)


def _round_up(n, m):
    return ((n + m - 1) // m) * m


def pack_params(params):
    """One-time parameter prep (hoist bf16 casts + fc4 lane padding out of forward)."""
    out_size = int(params["w4"].shape[1])
    assert out_size <= PAD_N, "output_size must be <= 128 for the lane-dense store"
    w4p = jnp.zeros((params["w4"].shape[0], PAD_N), jnp.bfloat16)
    w4p = w4p.at[:, :out_size].set(params["w4"].astype(jnp.bfloat16))
    # Pad lanes: zero weight columns + very negative bias -> ~0 softmax probability.
    b4p = jnp.full((1, PAD_N), -1e30, jnp.float32)
    b4p = b4p.at[:, :out_size].set(params["b4"].astype(jnp.float32))
    return {
        "w1": params["w1"].astype(jnp.bfloat16), "b1": params["b1"].astype(jnp.float32),
        "w2": params["w2"].astype(jnp.bfloat16), "b2": params["b2"].astype(jnp.float32),
        "w3": params["w3"].astype(jnp.bfloat16), "b3": params["b3"].astype(jnp.float32),
        "w4": w4p, "b4": b4p, "out_size": out_size,
    }


def policy_network_forward(x, packed, *, batch_tile=2048):
    """x: [B, input_size] float32/bfloat16. packed: output of pack_params()."""
    B, in_size = x.shape
    out_size = packed["out_size"]
    assert batch_tile % 8 == 0

    # Tile selection (perf fix): one exact-size tile for small batches, fixed large
    # tiles (multi-step "parallel" grid -> v7x megacore) for big batches.
    if B <= batch_tile:
        tb = _round_up(max(B, 8), 8)
    else:
        tb = batch_tile
    b_pad = _round_up(B, tb)

    # bf16 activations halve input DMA bytes; accumulation stays f32 in-kernel.
    xb = x.astype(jnp.bfloat16)
    x_pad = xb if b_pad == B else jnp.pad(xb, ((0, b_pad - B), (0, 0)))
    grid = (b_pad // tb,)

    def row_spec(feat):
        return pl.BlockSpec((tb, feat), lambda i: (i, 0))

    def resident_spec(arr):  # whole array, same block every grid step (VMEM-resident)
        return pl.BlockSpec(arr.shape, lambda i: (0, 0))

    weight_keys = ("w1", "b1", "w2", "b2", "w3", "b3", "w4", "b4")
    weight_bytes = sum(int(packed[k].size) * packed[k].dtype.itemsize for k in weight_keys)
    cost = pl.CostEstimate(
        flops=2 * b_pad * (in_size * 32 + 32 * 64 + 64 * 128 + 128 * PAD_N),
        transcendentals=b_pad * PAD_N,                       # exp in the softmax
        bytes_accessed=x_pad.size * 2 + b_pad * PAD_N * 2 + weight_bytes,
    )

    out_pad = pl.pallas_call(
        policy_mlp_kernel,
        out_shape=jax.ShapeDtypeStruct((b_pad, PAD_N), jnp.bfloat16),
        grid=grid,
        in_specs=[
            row_spec(in_size),
            resident_spec(packed["w1"]), resident_spec(packed["b1"]),
            resident_spec(packed["w2"]), resident_spec(packed["b2"]),
            resident_spec(packed["w3"]), resident_spec(packed["b3"]),
            resident_spec(packed["w4"]), resident_spec(packed["b4"]),
        ],
        out_specs=row_spec(PAD_N),
        compiler_params=pltpu.CompilerParams(
            dimension_semantics=("parallel",)),
        cost_estimate=cost,
    )(x_pad, packed["w1"], packed["b1"], packed["w2"], packed["b2"],
      packed["w3"], packed["b3"], packed["w4"], packed["b4"])

    # Small slice (B x out_size) + cheap f32 upcast of the final probabilities.
    return out_pad[:B, :out_size].astype(jnp.float32)


def init_params(key, input_size, output_size):
    """Mirrors PyTorch nn.Linear default init: uniform(-1/sqrt(fan_in), 1/sqrt(fan_in))."""
    sizes = [(input_size, 32), (32, 64), (64, 128), (128, output_size)]
    params = {}
    for i, (fan_in, fan_out) in enumerate(sizes, start=1):
        key, kw, kb = jax.random.split(key, 3)
        bound = 1.0 / jnp.sqrt(jnp.float32(fan_in))
        params[f"w{i}"] = jax.random.uniform(
            kw, (fan_in, fan_out), jnp.float32, minval=-bound, maxval=bound)
        params[f"b{i}"] = jax.random.uniform(
            kb, (1, fan_out), jnp.float32, minval=-bound, maxval=bound)
    return params


def reference_forward_f32(x, params):
    h = jnp.maximum(x @ params["w1"] + params["b1"], 0.0)
    h = jnp.maximum(h @ params["w2"] + params["b2"], 0.0)
    h = jnp.maximum(h @ params["w3"] + params["b3"], 0.0)
    logits = h @ params["w4"] + params["b4"]
    return jax.nn.softmax(logits, axis=-1)


def reference_forward_bf16(x, params):
    """Same dtype policy as the kernel (bf16 matmul operands, f32 accumulation)."""
    def lin(h, w, b):
        return jnp.dot(h.astype(jnp.bfloat16), w.astype(jnp.bfloat16),
                       preferred_element_type=jnp.float32) + b
    h = jnp.maximum(lin(x, params["w1"], params["b1"]), 0.0)
    h = jnp.maximum(lin(h, params["w2"], params["b2"]), 0.0)
    h = jnp.maximum(lin(h, params["w3"], params["b3"]), 0.0)
    logits = lin(h, params["w4"], params["b4"])
    return jax.nn.softmax(logits, axis=-1)


if __name__ == "__main__":
    key = jax.random.PRNGKey(0)
    input_size, output_size, batch = 16, 4, 300  # 300 exercises the padding path

    key, kx = jax.random.split(key)
    x = jax.random.normal(kx, (batch, input_size), dtype=jnp.float32)
    params = init_params(key, input_size, output_size)
    packed = pack_params(params)  # done once, reused for every forward call

    out = policy_network_forward(x, packed)
    out = jax.block_until_ready(out)

    assert out.shape == (batch, output_size)
    ref_bf16 = reference_forward_bf16(x, params)
    ref_f32 = reference_forward_f32(x, params)
    # Output is stored in bf16 (write-amplification fix), so loosen tolerances slightly.
    assert jnp.allclose(out, ref_bf16, atol=1e-2, rtol=1e-2), "mismatch vs bf16 reference"
    assert jnp.allclose(out, ref_f32, atol=5e-2), "mismatch vs f32 reference"
    assert jnp.allclose(jnp.sum(out, axis=-1), 1.0, atol=1e-2), "softmax rows must sum to ~1"

    print("KERNEL_OK")
</pallas_src>

<mosaic_0001>
module attributes {stable_mosaic.version = 11 : i64} {
  func.func @policy_mlp_kernel(%arg0: i32, %arg1: memref<304x16xbf16, #tpu.memory_space<vmem>>, %arg2: memref<16x32xbf16, #tpu.memory_space<vmem>>, %arg3: memref<1x32xf32, #tpu.memory_space<vmem>>, %arg4: memref<32x64xbf16, #tpu.memory_space<vmem>>, %arg5: memref<1x64xf32, #tpu.memory_space<vmem>>, %arg6: memref<64x128xbf16, #tpu.memory_space<vmem>>, %arg7: memref<1x128xf32, #tpu.memory_space<vmem>>, %arg8: memref<128x128xbf16, #tpu.memory_space<vmem>>, %arg9: memref<1x128xf32, #tpu.memory_space<vmem>>, %arg10: memref<304x128xbf16, #tpu.memory_space<vmem>>) attributes {dimension_semantics = [#tpu.dimension_semantics<parallel>], iteration_bounds = array<i64: 1>, scalar_prefetch = 0 : i64, scratch_operands = 0 : i64, tpu.core_type = #tpu.core_type<tc>, window_params = [{transform_indices = @transform_0, window_bounds = array<i64: 304, 16>}, {pipeline_mode = #tpu.pipeline_mode<synchronous>, transform_indices = @transform_1, window_bounds = array<i64: 16, 32>}, {pipeline_mode = #tpu.pipeline_mode<synchronous>, transform_indices = @transform_2, window_bounds = array<i64: 1, 32>}, {pipeline_mode = #tpu.pipeline_mode<synchronous>, transform_indices = @transform_3, window_bounds = array<i64: 32, 64>}, {pipeline_mode = #tpu.pipeline_mode<synchronous>, transform_indices = @transform_4, window_bounds = array<i64: 1, 64>}, {pipeline_mode = #tpu.pipeline_mode<synchronous>, transform_indices = @transform_5, window_bounds = array<i64: 64, 128>}, {pipeline_mode = #tpu.pipeline_mode<synchronous>, transform_indices = @transform_6, window_bounds = array<i64: 1, 128>}, {pipeline_mode = #tpu.pipeline_mode<synchronous>, transform_indices = @transform_7, window_bounds = array<i64: 128, 128>}, {pipeline_mode = #tpu.pipeline_mode<synchronous>, transform_indices = @transform_8, window_bounds = array<i64: 1, 128>}, {transform_indices = @transform_9, window_bounds = array<i64: 304, 128>}]} {
    %c0 = arith.constant 0 : index
    %c0_0 = arith.constant 0 : index
    %0 = vector.load %arg1[%c0, %c0_0] : memref<304x16xbf16, #tpu.memory_space<vmem>>, vector<304x16xbf16>
    %c0_1 = arith.constant 0 : index
    %c0_2 = arith.constant 0 : index
    %1 = vector.load %arg2[%c0_1, %c0_2] : memref<16x32xbf16, #tpu.memory_space<vmem>>, vector<16x32xbf16>
    %cst = arith.constant dense<0.000000e+00> : vector<304x32xf32>
    %2 = tpu.matmul %0, %1, %cst {dimension_numbers = #tpu.dot_dimension_numbers<[1], [0], [0], [1], [0, 0, 1, 1], [], []>} : vector<304x16xbf16>, vector<16x32xbf16>, vector<304x32xf32> -> vector<304x32xf32>
    %c0_3 = arith.constant 0 : index
    %c0_4 = arith.constant 0 : index
    %3 = vector.load %arg3[%c0_3, %c0_4] : memref<1x32xf32, #tpu.memory_space<vmem>>, vector<1x32xf32>
    %4 = vector.broadcast %3 : vector<1x32xf32> to vector<304x32xf32>
    %5 = arith.addf %2, %4 : vector<304x32xf32>
    %cst_5 = arith.constant 0.000000e+00 : f32
    %6 = vector.broadcast %cst_5 : f32 to vector<304x32xf32>
    %7 = arith.maximumf %5, %6 : vector<304x32xf32>
    %8 = arith.truncf %7 : vector<304x32xf32> to vector<304x32xbf16>
    %c0_6 = arith.constant 0 : index
    %c0_7 = arith.constant 0 : index
    %9 = vector.load %arg4[%c0_6, %c0_7] : memref<32x64xbf16, #tpu.memory_space<vmem>>, vector<32x64xbf16>
    %cst_8 = arith.constant dense<0.000000e+00> : vector<304x64xf32>
    %10 = tpu.matmul %8, %9, %cst_8 {dimension_numbers = #tpu.dot_dimension_numbers<[1], [0], [0], [1], [0, 0, 1, 1], [], []>} : vector<304x32xbf16>, vector<32x64xbf16>, vector<304x64xf32> -> vector<304x64xf32>
    %c0_9 = arith.constant 0 : index
    %c0_10 = arith.constant 0 : index
    %11 = vector.load %arg5[%c0_9, %c0_10] : memref<1x64xf32, #tpu.memory_space<vmem>>, vector<1x64xf32>
    %12 = vector.broadcast %11 : vector<1x64xf32> to vector<304x64xf32>
    %13 = arith.addf %10, %12 : vector<304x64xf32>
    %cst_11 = arith.constant 0.000000e+00 : f32
    %14 = vector.broadcast %cst_11 : f32 to vector<304x64xf32>
    %15 = arith.maximumf %13, %14 : vector<304x64xf32>
    %16 = arith.truncf %15 : vector<304x64xf32> to vector<304x64xbf16>
    %c0_12 = arith.constant 0 : index
    %c0_13 = arith.constant 0 : index
    %17 = vector.load %arg6[%c0_12, %c0_13] : memref<64x128xbf16, #tpu.memory_space<vmem>>, vector<64x128xbf16>
    %cst_14 = arith.constant dense<0.000000e+00> : vector<304x128xf32>
    %18 = tpu.matmul %16, %17, %cst_14 {dimension_numbers = #tpu.dot_dimension_numbers<[1], [0], [0], [1], [0, 0, 1, 1], [], []>} : vector<304x64xbf16>, vector<64x128xbf16>, vector<304x128xf32> -> vector<304x128xf32>
    %c0_15 = arith.constant 0 : index
    %c0_16 = arith.constant 0 : index
    %19 = vector.load %arg7[%c0_15, %c0_16] : memref<1x128xf32, #tpu.memory_space<vmem>>, vector<1x128xf32>
    %20 = vector.broadcast %19 : vector<1x128xf32> to vector<304x128xf32>
    %21 = arith.addf %18, %20 : vector<304x128xf32>
    %cst_17 = arith.constant 0.000000e+00 : f32
    %22 = vector.broadcast %cst_17 : f32 to vector<304x128xf32>
    %23 = arith.maximumf %21, %22 : vector<304x128xf32>
    %24 = arith.truncf %23 : vector<304x128xf32> to vector<304x128xbf16>
    %c0_18 = arith.constant 0 : index
    %c0_19 = arith.constant 0 : index
    %25 = vector.load %arg8[%c0_18, %c0_19] : memref<128x128xbf16, #tpu.memory_space<vmem>>, vector<128x128xbf16>
    %cst_20 = arith.constant dense<0.000000e+00> : vector<304x128xf32>
    %26 = tpu.matmul %24, %25, %cst_20 {dimension_numbers = #tpu.dot_dimension_numbers<[1], [0], [0], [1], [0, 0, 1, 1], [], []>} : vector<304x128xbf16>, vector<128x128xbf16>, vector<304x128xf32> -> vector<304x128xf32>
    %c0_21 = arith.constant 0 : index
    %c0_22 = arith.constant 0 : index
    %27 = vector.load %arg9[%c0_21, %c0_22] : memref<1x128xf32, #tpu.memory_space<vmem>>, vector<1x128xf32>
    %28 = vector.broadcast %27 : vector<1x128xf32> to vector<304x128xf32>
    %29 = arith.addf %26, %28 : vector<304x128xf32>
    %cst_23 = arith.constant dense<0xFF800000> : vector<304xf32>
    %30 = vector.multi_reduction <maximumf>, %29, %cst_23 [1] : vector<304x128xf32> to vector<304xf32>
    %31 = vector.shape_cast %30 : vector<304xf32> to vector<304x1xf32>
    %32 = vector.broadcast %31 : vector<304x1xf32> to vector<304x128xf32>
    %33 = arith.subf %29, %32 : vector<304x128xf32>
    %34 = math.exp %33 : vector<304x128xf32>
    %cst_24 = arith.constant dense<0.000000e+00> : vector<304xf32>
    %35 = vector.multi_reduction <add>, %34, %cst_24 [1] : vector<304x128xf32> to vector<304xf32>
    %36 = vector.shape_cast %35 : vector<304xf32> to vector<304x1xf32>
    %37 = tpu.reciprocal %36 {approx = true} : vector<304x1xf32> -> vector<304x1xf32>
    %38 = vector.broadcast %37 : vector<304x1xf32> to vector<304x128xf32>
    %39 = arith.mulf %34, %38 : vector<304x128xf32>
    %40 = arith.truncf %39 : vector<304x128xf32> to vector<304x128xbf16>
    %c0_25 = arith.constant 0 : index
    %c0_26 = arith.constant 0 : index
    %41 = vector.load %arg10[%c0_25, %c0_26] : memref<304x128xbf16, #tpu.memory_space<vmem>>, vector<304x128xbf16>
    tpu.vector_store %arg10[%c0_25, %c0_26], %40 {strides = array<i32>} : memref<304x128xbf16, #tpu.memory_space<vmem>>, vector<304x128xbf16>,
    return
  }
  func.func @transform_0(%arg0: i32) -> (i32, i32) {
    %c0_i32 = arith.constant 0 : i32
    %c0_i32_0 = arith.constant 0 : i32
    return %arg0, %c0_i32 : i32, i32
  }
  func.func @transform_1(%arg0: i32) -> (i32, i32) {
    %c0_i32 = arith.constant 0 : i32
    %c0_i32_0 = arith.constant 0 : i32
    %c0_i32_1 = arith.constant 0 : i32
    return %c0_i32, %c0_i32_0 : i32, i32
  }
  func.func @transform_2(%arg0: i32) -> (i32, i32) {
    %c0_i32 = arith.constant 0 : i32
    %c0_i32_0 = arith.constant 0 : i32
    %c0_i32_1 = arith.constant 0 : i32
    return %c0_i32, %c0_i32_0 : i32, i32
  }
  func.func @transform_3(%arg0: i32) -> (i32, i32) {
    %c0_i32 = arith.constant 0 : i32
    %c0_i32_0 = arith.constant 0 : i32
    %c0_i32_1 = arith.constant 0 : i32
    return %c0_i32, %c0_i32_0 : i32, i32
  }
  func.func @transform_4(%arg0: i32) -> (i32, i32) {
    %c0_i32 = arith.constant 0 : i32
    %c0_i32_0 = arith.constant 0 : i32
    %c0_i32_1 = arith.constant 0 : i32
    return %c0_i32, %c0_i32_0 : i32, i32
  }
  func.func @transform_5(%arg0: i32) -> (i32, i32) {
    %c0_i32 = arith.constant 0 : i32
    %c0_i32_0 = arith.constant 0 : i32
    %c0_i32_1 = arith.constant 0 : i32
    return %c0_i32, %c0_i32_0 : i32, i32
  }
  func.func @transform_6(%arg0: i32) -> (i32, i32) {
    %c0_i32 = arith.constant 0 : i32
    %c0_i32_0 = arith.constant 0 : i32
    %c0_i32_1 = arith.constant 0 : i32
    return %c0_i32, %c0_i32_0 : i32, i32
  }
  func.func @transform_7(%arg0: i32) -> (i32, i32) {
    %c0_i32 = arith.constant 0 : i32
    %c0_i32_0 = arith.constant 0 : i32
    %c0_i32_1 = arith.constant 0 : i32
    return %c0_i32, %c0_i32_0 : i32, i32
  }
  func.func @transform_8(%arg0: i32) -> (i32, i32) {
    %c0_i32 = arith.constant 0 : i32
    %c0_i32_0 = arith.constant 0 : i32
    %c0_i32_1 = arith.constant 0 : i32
    return %c0_i32, %c0_i32_0 : i32, i32
  }
  func.func @transform_9(%arg0: i32) -> (i32, i32) {
    %c0_i32 = arith.constant 0 : i32
    %c0_i32_0 = arith.constant 0 : i32
    return %arg0, %c0_i32 : i32, i32
  }
}

</mosaic_0001>

<llo_original>
// kernel: tpu_custom_call.1
$region0: #{tpu_custom_call.1}
  #allocation0 [shape = 'u32[]', space=smem, size = 0x4, offset = 0x4, fixed_abs, tag = 'smem constant byte address 0x4 - core index']
  #allocation1 [shape = 'u32[144,128]{1,0:T(1,128)}', space=vmem, size = 0x12000, scoped, tag = 'internal scratch']
  %s0 = inlined_call_operand.vmem [shape: bf16[304,16], index: 0, kind: input, shape index: {}]
  %s1 = inlined_call_operand.vmem [shape: bf16[16,32], index: 1, kind: input, shape index: {}]
  %s2 = inlined_call_operand.vmem [shape: f32[1,32], index: 2, kind: input, shape index: {}]
  %s3 = inlined_call_operand.vmem [shape: bf16[32,64], index: 3, kind: input, shape index: {}]
  %s4 = inlined_call_operand.vmem [shape: f32[1,64], index: 4, kind: input, shape index: {}]
  %s5 = inlined_call_operand.vmem [shape: bf16[64,128], index: 5, kind: input, shape index: {}]
  %s6 = inlined_call_operand.vmem [shape: f32[1,128], index: 6, kind: input, shape index: {}]
  %s7 = inlined_call_operand.vmem [shape: bf16[128,128], index: 7, kind: input, shape index: {}]
  %s8 = inlined_call_operand.vmem [shape: f32[1,128], index: 8, kind: input, shape index: {}]
  %s9 = inlined_call_operand.hbm [shape: bf16[304,128], index: 9, kind: output, shape index: {}]
  %s10 = sld [smem:[#allocation0]]
  $region46: #{tpu_custom_call.1} parent=0
    _
  %s12 = ssub.s32 1, %s10
  %s13 = scalar_select 0, %s12, %s10
  $region1: #{tpu_custom_call.1} parent=0
    #allocation2 [shape = 'u8[77824]{0}', space=vmem, size = 0x13000, scoped, tag = 'output window, operand 0, single buffered']
    #allocation3 [shape = 's32[1]{0}', space=sflag, size = 0x4, scoped, tag = 'scoped memory for tpu_custom_call.1']
    %14 = vsyncpa [#allocation3], 0
    // Predicated region
    $region2: #{tpu_custom_call.1} parent=1 // pred_check
      _
    $region3: #{tpu_custom_call.1} parent=1 // pred_check_branch
      %16 = sbr.rel (0) target = $region5
    $region4: #{tpu_custom_call.1} parent=1 // pred_region
      _
    $region5: #{tpu_custom_call.1} parent=1 // pred_fallthru
      _
    // Predicated region
    $region6: #{tpu_custom_call.1} parent=1 // pred_check
      _
    $region7: #{tpu_custom_call.1} parent=1 // pred_check_branch
      %18 = sbr.rel (0) target = $region9
    $region8: #{tpu_custom_call.1} parent=1 // pred_region
      _
    $region9: #{tpu_custom_call.1} parent=1 // pred_fallthru
      _
    // Predicated region
    $region10: #{tpu_custom_call.1} parent=1 // pred_check
      _
    $region11: #{tpu_custom_call.1} parent=1 // pred_check_branch
      %20 = sbr.rel (0) target = $region13
    $region12: #{tpu_custom_call.1} parent=1 // pred_region
      _
    $region13: #{tpu_custom_call.1} parent=1 // pred_fallthru
      _
    // Predicated region
    $region14: #{tpu_custom_call.1} parent=1 // pred_check
      _
    $region15: #{tpu_custom_call.1} parent=1 // pred_check_branch
      %22 = sbr.rel (0) target = $region17
    $region16: #{tpu_custom_call.1} parent=1 // pred_region
      _
    $region17: #{tpu_custom_call.1} parent=1 // pred_fallthru
      _
    // Predicated region
    $region18: #{tpu_custom_call.1} parent=1 // pred_check
      _
    $region19: #{tpu_custom_call.1} parent=1 // pred_check_branch
      %24 = sbr.rel (0) target = $region21
    $region20: #{tpu_custom_call.1} parent=1 // pred_region
      _
    $region21: #{tpu_custom_call.1} parent=1 // pred_fallthru
      _
    // Predicated region
    $region22: #{tpu_custom_call.1} parent=1 // pred_check
      _
    $region23: #{tpu_custom_call.1} parent=1 // pred_check_branch
      %26 = sbr.rel (0) target = $region25
    $region24: #{tpu_custom_call.1} parent=1 // pred_region
      _
    $region25: #{tpu_custom_call.1} parent=1 // pred_fallthru
      _
    // Predicated region
    $region26: #{tpu_custom_call.1} parent=1 // pred_check
      _
    $region27: #{tpu_custom_call.1} parent=1 // pred_check_branch
      %28 = sbr.rel (0) target = $region29
    $region28: #{tpu_custom_call.1} parent=1 // pred_region
      _
    $region29: #{tpu_custom_call.1} parent=1 // pred_fallthru
      _
    // Predicated region
    $region30: #{tpu_custom_call.1} parent=1 // pred_check
      _
    $region31: #{tpu_custom_call.1} parent=1 // pred_check_branch
      %30 = sbr.rel (0) target = $region33
    $region32: #{tpu_custom_call.1} parent=1 // pred_region
      _
    $region33: #{tpu_custom_call.1} parent=1 // pred_fallthru
      _
    // Predicated region
    $region34: #{tpu_custom_call.1} parent=1 // pred_check
      _
    $region35: #{tpu_custom_call.1} parent=1 // pred_check_branch
      %32 = sbr.rel (0) target = $region37
    $region36: #{tpu_custom_call.1} parent=1 // pred_region
      _
    $region37: #{tpu_custom_call.1} parent=1 // pred_fallthru
      _
    %v34 = vld [vmem:[%s0] sm:$0xf]
    %v35 = vld [vmem:[%s0 + $0x4] sm:$0xf]
    %v36 = vld [vmem:[%s0 + $0x8] sm:$0xf]
    %v37 = vld [vmem:[%s0 + $0xc] sm:$0xf]
    %v38 = vld [vmem:[%s0 + $0x10] sm:$0xf]
    %v39 = vld [vmem:[%s0 + $0x14] sm:$0xf]
    %v40 = vld [vmem:[%s0 + $0x18] sm:$0xf]
    %v41 = vld [vmem:[%s0 + $0x1c] sm:$0xf]
    %v42 = vld [vmem:[%s0 + $0x20] sm:$0xf]
    %v43 = vld [vmem:[%s0 + $0x24] sm:$0xf]
    %v44 = vld [vmem:[%s0 + $0x28] sm:$0xf]
    %v45 = vld [vmem:[%s0 + $0x2c] sm:$0xf]
    %v46 = vld [vmem:[%s0 + $0x30] sm:$0xf]
    %v47 = vld [vmem:[%s0 + $0x34] sm:$0xf]
    %v48 = vld [vmem:[%s0 + $0x38] sm:$0xf]
    %v49 = vld [vmem:[%s0 + $0x3c] sm:$0xf]
    %v50 = vld [vmem:[%s0 + $0x40] sm:$0xf]
    %v51 = vld [vmem:[%s0 + $0x44] sm:$0xf]
    %v52 = vld [vmem:[%s0 + $0x48] sm:$0xf]
    %v53 = vld [vmem:[%s0 + $0x4c] sm:$0xf]
    %v54 = vld [vmem:[%s0 + $0x50] sm:$0xf]
    %v55 = vld [vmem:[%s0 + $0x54] sm:$0xf]
    %v56 = vld [vmem:[%s0 + $0x58] sm:$0xf]
    %v57 = vld [vmem:[%s0 + $0x5c] sm:$0xf]
    %v58 = vld [vmem:[%s0 + $0x60] sm:$0xf]
    %v59 = vld [vmem:[%s0 + $0x64] sm:$0xf]
    %v60 = vld [vmem:[%s0 + $0x68] sm:$0xf]
    %v61 = vld [vmem:[%s0 + $0x6c] sm:$0xf]
    %v62 = vld [vmem:[%s0 + $0x70] sm:$0xf]
    %v63 = vld [vmem:[%s0 + $0x74] sm:$0xf]
    %v64 = vld [vmem:[%s0 + $0x78] sm:$0xf]
    %v65 = vld [vmem:[%s0 + $0x7c] sm:$0xf]
    %v66 = vld [vmem:[%s0 + $0x80] sm:$0xf]
    %v67 = vld [vmem:[%s0 + $0x84] sm:$0xf]
    %v68 = vld [vmem:[%s0 + $0x88] sm:$0xf]
    %v69 = vld [vmem:[%s0 + $0x8c] sm:$0xf]
    %v70 = vld [vmem:[%s0 + $0x90] sm:$0xf]
    %v71 = vld [vmem:[%s0 + $0x94] sm:$0xf]
    %v72 = vld [vmem:[%s1] sm:$0xf]
    %v73 = vld [vmem:[%s1 + $0x4] sm:$0xf]
    %v74 = vld [vmem:[%s2] sm:$0x1]
    %v76 = vlaneseq
    %v77 = vshrl.u32 %v76, 7
    %v78 = vsub.s32 0, %v77
    %v79 = vrot.slane %v74, %v78
    %v119 = vunpack.c.l.b16 %v34
    %v120 = vunpack.c.l.b16 %v35
    %v121 = vunpack.c.l.b16 %v36
    %v122 = vunpack.c.l.b16 %v37
    %v123 = vunpack.c.l.b16 %v38
    %v124 = vunpack.c.l.b16 %v39
    %v125 = vunpack.c.l.b16 %v40
    %v126 = vunpack.c.l.b16 %v41
    %v127 = vunpack.c.l.b16 %v42
    %v128 = vunpack.c.l.b16 %v43
    %v129 = vunpack.c.l.b16 %v44
    %v130 = vunpack.c.l.b16 %v45
    %v131 = vunpack.c.l.b16 %v46
    %v132 = vunpack.c.l.b16 %v47
    %v133 = vunpack.c.l.b16 %v48
    %v134 = vunpack.c.l.b16 %v49
    %v135 = vunpack.c.l.b16 %v50
    %v136 = vunpack.c.l.b16 %v51
    %v137 = vunpack.c.l.b16 %v52
    %v138 = vunpack.c.l.b16 %v53
    %v139 = vunpack.c.l.b16 %v54
    %v140 = vunpack.c.l.b16 %v55
    %v141 = vunpack.c.l.b16 %v56
    %v142 = vunpack.c.l.b16 %v57
    %v143 = vunpack.c.l.b16 %v58
    %v144 = vunpack.c.l.b16 %v59
    %v145 = vunpack.c.l.b16 %v60
    %v146 = vunpack.c.l.b16 %v61
    %v147 = vunpack.c.l.b16 %v62
    %v148 = vunpack.c.l.b16 %v63
    %v149 = vunpack.c.l.b16 %v64
    %v150 = vunpack.c.l.b16 %v65
    %v151 = vunpack.c.l.b16 %v66
    %v152 = vunpack.c.l.b16 %v67
    %v153 = vunpack.c.l.b16 %v68
    %v154 = vunpack.c.l.b16 %v69
    %v155 = vunpack.c.l.b16 %v70
    %v156 = vunpack.c.l.b16 %v71
    %v157 = vpack.c.b16 %v120, %v119
    %v158 = vpack.c.b16 %v122, %v121
    %v159 = vpack.c.b16 %v124, %v123
    %v160 = vpack.c.b16 %v126, %v125
    %v161 = vpack.c.b16 %v128, %v127
    %v162 = vpack.c.b16 %v130, %v129
    %v163 = vpack.c.b16 %v132, %v131
    %v164 = vpack.c.b16 %v134, %v133
    %v165 = vpack.c.b16 %v136, %v135
    %v166 = vpack.c.b16 %v138, %v137
    %v167 = vpack.c.b16 %v140, %v139
    %v168 = vpack.c.b16 %v142, %v141
    %v169 = vpack.c.b16 %v144, %v143
    %v170 = vpack.c.b16 %v146, %v145
    %v171 = vpack.c.b16 %v148, %v147
    %v172 = vpack.c.b16 %v150, %v149
    %v173 = vpack.c.b16 %v152, %v151
    %v174 = vpack.c.b16 %v154, %v153
    %v175 = vpack.c.b16 %v156, %v155
    %v178 = vunpack.c.l.b16 %v72
    %v179 = vunpack.c.l.b16 %v73
    %v180 = vpack.c.b16 %v179, %v178
    %vm182 = vcmask 130048
    %v184 = vsel %vm182, %v157, 0
    %v187 = vsel %vm182, %v158, 0
    %v190 = vsel %vm182, %v159, 0
    %v193 = vsel %vm182, %v160, 0
    %v196 = vsel %vm182, %v161, 0
    %v199 = vsel %vm182, %v162, 0
    %v202 = vsel %vm182, %v163, 0
    %v205 = vsel %vm182, %v164, 0
    %v208 = vsel %vm182, %v165, 0
    %v211 = vsel %vm182, %v166, 0
    %v214 = vsel %vm182, %v167, 0
    %v217 = vsel %vm182, %v168, 0
    %v220 = vsel %vm182, %v169, 0
    %v223 = vsel %vm182, %v170, 0
    %v226 = vsel %vm182, %v171, 0
    %v229 = vsel %vm182, %v172, 0
    %v232 = vsel %vm182, %v173, 0
    %v235 = vsel %vm182, %v174, 0
    %v238 = vsel %vm182, %v175, 0
    %240 = vmatprep.subr.bf16.mxu0 0
    %241 = vmatpush1.bf16.msra.mxu0 %v180
    %242 = vmatprep.subr.bf16.mxu0 0
    %243 = vmatpush1.bf16.msra.mxu0 0
    %244 = vmatprep.subr.bf16.mxu0 0
    %245 = vmatpush1.bf16.msra.mxu0 0
    %246 = vmatprep.subr.bf16.mxu0 0
    %247 = vmatpush1.bf16.msra.mxu0 0
    %248 = vmatprep.subr.bf16.mxu0 0
    %249 = vmatpush1.bf16.msra.mxu0 0
    %250 = vmatprep.subr.bf16.mxu0 0
    %251 = vmatpush1.bf16.msra.mxu0 0
    %252 = vmatprep.subr.bf16.mxu0 0
    %253 = vmatpush1.bf16.msra.mxu0 0
    %254 = vmatprep.subr.bf16.mxu0 0
    %255 = vmatpush1.bf16.msra.mxu0 0
    %256 = vmatprep.subr.bf16.mxu0 0
    %257 = vmatpush1.bf16.msra.mxu0 0
    %258 = vmatprep.subr.bf16.mxu0 0
    %259 = vmatpush1.bf16.msra.mxu0 0
    %260 = vmatprep.subr.bf16.mxu0 0
    %261 = vmatpush1.bf16.msra.mxu0 0
    %262 = vmatprep.subr.bf16.mxu0 0
    %263 = vmatpush1.bf16.msra.mxu0 0
    %264 = vmatprep.subr.bf16.mxu0 0
    %265 = vmatpush1.bf16.msra.mxu0 0
    %266 = vmatprep.subr.bf16.mxu0 0
    %267 = vmatpush1.bf16.msra.mxu0 0
    %268 = vmatprep.subr.bf16.mxu0 0
    %269 = vmatpush1.bf16.msra.mxu0 0
    %270 = vmatprep.subr.bf16.mxu0 0
    %271 = vmatpush1.bf16.msra.mxu0 0
    %272 = vmatprep.mubr.bf16.mxu0 0
    %273 = vmatmul.mubr.bf16.gmra.mrb[0].mxu0 %v184
    %v274 = vpop.f32.mrb[0].mxu0
    %v275 = vadd.f32 %v79, %v274
    %v276 = vpop.f32.mrb[0].mxu0
    %v277 = vpop.f32.mrb[0].mxu0
    %v278 = vadd.f32 %v79, %v277
    %v279 = vpop.f32.mrb[0].mxu0
    %280 = vmatprep.mubr.bf16.mxu0 0
    %281 = vmatmul.mubr.bf16.gmra.mrb[0].mxu0 %v187
    %v282 = vpop.f32.mrb[0].mxu0
    %v283 = vadd.f32 %v79, %v282
    %v284 = vpop.f32.mrb[0].mxu0
    %v285 = vpop.f32.mrb[0].mxu0
    %v286 = vadd.f32 %v79, %v285
    %v287 = vpop.f32.mrb[0].mxu0
    %288 = vmatprep.mubr.bf16.mxu0 0
    %289 = vmatmul.mubr.bf16.gmra.mrb[0].mxu0 %v190
    %v290 = vpop.f32.mrb[0].mxu0
    %v291 = vadd.f32 %v79, %v290
    %v292 = vpop.f32.mrb[0].mxu0
    %v293 = vpop.f32.mrb[0].mxu0
    %v294 = vadd.f32 %v79, %v293
    %v295 = vpop.f32.mrb[0].mxu0
    %296 = vmatprep.mubr.bf16.mxu0 0
    %297 = vmatmul.mubr.bf16.gmra.mrb[0].mxu0 %v193
    %v298 = vpop.f32.mrb[0].mxu0
    %v299 = vadd.f32 %v79, %v298
    %v300 = vpop.f32.mrb[0].mxu0
    %v301 = vpop.f32.mrb[0].mxu0
    %v302 = vadd.f32 %v79, %v301
    %v303 = vpop.f32.mrb[0].mxu0
    %304 = vmatprep.mubr.bf16.mxu0 0
    %305 = vmatmul.mubr.bf16.gmra.mrb[0].mxu0 %v196
    %v306 = vpop.f32.mrb[0].mxu0
    %v307 = vadd.f32 %v79, %v306
    %v308 = vpop.f32.mrb[0].mxu0
    %v309 = vpop.f32.mrb[0].mxu0
    %v310 = vadd.f32 %v79, %v309
    %v311 = vpop.f32.mrb[0].mxu0
    %312 = vmatprep.mubr.bf16.mxu0 0
    %313 = vmatmul.mubr.bf16.gmra.mrb[0].mxu0 %v199
    %v314 = vpop.f32.mrb[0].mxu0
    %v315 = vadd.f32 %v79, %v314
    %v316 = vpop.f32.mrb[0].mxu0
    %v317 = vpop.f32.mrb[0].mxu0
    %v318 = vadd.f32 %v79, %v317
    %v319 = vpop.f32.mrb[0].mxu0
    %320 = vmatprep.mubr.bf16.mxu0 0
    %321 = vmatmul.mubr.bf16.gmra.mrb[0].mxu0 %v202
    %v322 = vpop.f32.mrb[0].mxu0
    %v323 = vadd.f32 %v79, %v322
    %v324 = vpop.f32.mrb[0].mxu0
    %v325 = vpop.f32.mrb[0].mxu0
    %v326 = vadd.f32 %v79, %v325
    %v327 = vpop.f32.mrb[0].mxu0
    %328 = vmatprep.mubr.bf16.mxu0 0
    %329 = vmatmul.mubr.bf16.gmra.mrb[0].mxu0 %v205
    %v330 = vpop.f32.mrb[0].mxu0
    %v331 = vadd.f32 %v79, %v330
    %v332 = vpop.f32.mrb[0].mxu0
    %v333 = vpop.f32.mrb[0].mxu0
    %v334 = vadd.f32 %v79, %v333
    %v335 = vpop.f32.mrb[0].mxu0
    %336 = vmatprep.mubr.bf16.mxu0 0
    %337 = vmatmul.mubr.bf16.gmra.mrb[0].mxu0 %v208
    %v338 = vpop.f32.mrb[0].mxu0
    %v339 = vadd.f32 %v79, %v338
    %v340 = vpop.f32.mrb[0].mxu0
    %v341 = vpop.f32.mrb[0].mxu0
    %v342 = vadd.f32 %v79, %v341
    %v343 = vpop.f32.mrb[0].mxu0
    %344 = vmatprep.mubr.bf16.mxu0 0
    %345 = vmatmul.mubr.bf16.gmra.mrb[0].mxu0 %v211
    %v346 = vpop.f32.mrb[0].mxu0
    %v347 = vadd.f32 %v79, %v346
    %v348 = vpop.f32.mrb[0].mxu0
    %v349 = vpop.f32.mrb[0].mxu0
    %v350 = vadd.f32 %v79, %v349
    %v351 = vpop.f32.mrb[0].mxu0
    %352 = vmatprep.mubr.bf16.mxu0 0
    %353 = vmatmul.mubr.bf16.gmra.mrb[0].mxu0 %v214
    %v354 = vpop.f32.mrb[0].mxu0
    %v355 = vadd.f32 %v79, %v354
    %v356 = vpop.f32.mrb[0].mxu0
    %v357 = vpop.f32.mrb[0].mxu0
    %v358 = vadd.f32 %v79, %v357
    %v359 = vpop.f32.mrb[0].mxu0
    %360 = vmatprep.mubr.bf16.mxu0 0
    %361 = vmatmul.mubr.bf16.gmra.mrb[0].mxu0 %v217
    %v362 = vpop.f32.mrb[0].mxu0
    %v363 = vadd.f32 %v79, %v362
    %v364 = vpop.f32.mrb[0].mxu0
    %v365 = vpop.f32.mrb[0].mxu0
    %v366 = vadd.f32 %v79, %v365
    %v367 = vpop.f32.mrb[0].mxu0
    %368 = vmatprep.mubr.bf16.mxu0 0
    %369 = vmatmul.mubr.bf16.gmra.mrb[0].mxu0 %v220
    %v370 = vpop.f32.mrb[0].mxu0
    %v371 = vadd.f32 %v79, %v370
    %v372 = vpop.f32.mrb[0].mxu0
    %v373 = vpop.f32.mrb[0].mxu0
    %v374 = vadd.f32 %v79, %v373
    %v375 = vpop.f32.mrb[0].mxu0
    %376 = vmatprep.mubr.bf16.mxu0 0
    %377 = vmatmul.mubr.bf16.gmra.mrb[0].mxu0 %v223
    %v378 = vpop.f32.mrb[0].mxu0
    %v379 = vadd.f32 %v79, %v378
    %v380 = vpop.f32.mrb[0].mxu0
    %v381 = vpop.f32.mrb[0].mxu0
    %v382 = vadd.f32 %v79, %v381
    %v383 = vpop.f32.mrb[0].mxu0
    %384 = vmatprep.mubr.bf16.mxu0 0
    %385 = vmatmul.mubr.bf16.gmra.mrb[0].mxu0 %v226
    %v386 = vpop.f32.mrb[0].mxu0
    %v387 = vadd.f32 %v79, %v386
    %v388 = vpop.f32.mrb[0].mxu0
    %v389 = vpop.f32.mrb[0].mxu0
    %v390 = vadd.f32 %v79, %v389
    %v391 = vpop.f32.mrb[0].mxu0
    %392 = vmatprep.mubr.bf16.mxu0 0
    %393 = vmatmul.mubr.bf16.gmra.mrb[0].mxu0 %v229
    %v394 = vpop.f32.mrb[0].mxu0
    %v395 = vadd.f32 %v79, %v394
    %v396 = vpop.f32.mrb[0].mxu0
    %v397 = vpop.f32.mrb[0].mxu0
    %v398 = vadd.f32 %v79, %v397
    %v399 = vpop.f32.mrb[0].mxu0
    %400 = vmatprep.mubr.bf16.mxu0 0
    %401 = vmatmul.mubr.bf16.gmra.mrb[0].mxu0 %v232
    %v402 = vpop.f32.mrb[0].mxu0
    %v403 = vadd.f32 %v79, %v402
    %v404 = vpop.f32.mrb[0].mxu0
    %v405 = vpop.f32.mrb[0].mxu0
    %v406 = vadd.f32 %v79, %v405
    %v407 = vpop.f32.mrb[0].mxu0
    %408 = vmatprep.mubr.bf16.mxu0 0
    %409 = vmatmul.mubr.bf16.gmra.mrb[0].mxu0 %v235
    %v410 = vpop.f32.mrb[0].mxu0
    %v411 = vadd.f32 %v79, %v410
    %v412 = vpop.f32.mrb[0].mxu0
    %v413 = vpop.f32.mrb[0].mxu0
    %v414 = vadd.f32 %v79, %v413
    %v415 = vpop.f32.mrb[0].mxu0
    %416 = vmatprep.mubr.bf16.mxu0 0
    %417 = vmatmul.mubr.bf16.gmra.mrb[0].mxu0 %v238
    %v418 = vpop.f32.mrb[0].mxu0
    %v419 = vadd.f32 %v79, %v418
    %v420 = vpop.f32.mrb[0].mxu0
    %v421 = vpop.f32.mrb[0].mxu0
    %v422 = vadd.f32 %v79, %v421
    %v423 = vpop.f32.mrb[0].mxu0
    %424 = vdwg.mxu0
    %v425 = vmax.f32 %v275, 0.0
    %v426 = vmax.f32 %v278, 0.0
    %v427 = vmax.f32 %v283, 0.0
    %v428 = vmax.f32 %v286, 0.0
    %v429 = vmax.f32 %v291, 0.0
    %v430 = vmax.f32 %v294, 0.0
    %v431 = vmax.f32 %v299, 0.0
    %v432 = vmax.f32 %v302, 0.0
    %v433 = vmax.f32 %v307, 0.0
    %v434 = vmax.f32 %v310, 0.0
    %v435 = vmax.f32 %v315, 0.0
    %v436 = vmax.f32 %v318, 0.0
    %v437 = vmax.f32 %v323, 0.0
    %v438 = vmax.f32 %v326, 0.0
    %v439 = vmax.f32 %v331, 0.0
    %v440 = vmax.f32 %v334, 0.0
    %v441 = vmax.f32 %v339, 0.0
    %v442 = vmax.f32 %v342, 0.0
    %v443 = vmax.f32 %v347, 0.0
    %v444 = vmax.f32 %v350, 0.0
    %v445 = vmax.f32 %v355, 0.0
    %v446 = vmax.f32 %v358, 0.0
    %v447 = vmax.f32 %v363, 0.0
    %v448 = vmax.f32 %v366, 0.0
    %v449 = vmax.f32 %v371, 0.0
    %v450 = vmax.f32 %v374, 0.0
    %v451 = vmax.f32 %v379, 0.0
    %v452 = vmax.f32 %v382, 0.0
    %v453 = vmax.f32 %v387, 0.0
    %v454 = vmax.f32 %v390, 0.0
    %v455 = vmax.f32 %v395, 0.0
    %v456 = vmax.f32 %v398, 0.0
    %v457 = vmax.f32 %v403, 0.0
    %v458 = vmax.f32 %v406, 0.0
    %v459 = vmax.f32 %v411, 0.0
    %v460 = vmax.f32 %v414, 0.0
    %v461 = vmax.f32 %v419, 0.0
    %v462 = vmax.f32 %v422, 0.0
    %v463 = vpack.c.bf16 %v426, %v425
    %v464 = vpack.c.bf16 %v428, %v427
    %v465 = vpack.c.bf16 %v430, %v429
    %v466 = vpack.c.bf16 %v432, %v431
    %v467 = vpack.c.bf16 %v434, %v433
    %v468 = vpack.c.bf16 %v436, %v435
    %v469 = vpack.c.bf16 %v438, %v437
    %v470 = vpack.c.bf16 %v440, %v439
    %v471 = vpack.c.bf16 %v442, %v441
    %v472 = vpack.c.bf16 %v444, %v443
    %v473 = vpack.c.bf16 %v446, %v445
    %v474 = vpack.c.bf16 %v448, %v447
    %v475 = vpack.c.bf16 %v450, %v449
    %v476 = vpack.c.bf16 %v452, %v451
    %v477 = vpack.c.bf16 %v454, %v453
    %v478 = vpack.c.bf16 %v456, %v455
    %v479 = vpack.c.bf16 %v458, %v457
    %v480 = vpack.c.bf16 %v460, %v459
    %v481 = vpack.c.bf16 %v462, %v461
    %v482 = vld [vmem:[%s3] sm:$0xf]
    %v483 = vld [vmem:[%s3 + $0x4] sm:$0xf]
    %v484 = vld [vmem:[%s3 + $0x8] sm:$0xf]
    %v485 = vld [vmem:[%s3 + $0xc] sm:$0xf]
    %v486 = vld [vmem:[%s4] sm:$0x1]
    %v488 = vlaneseq
    %v489 = vshrl.u32 %v488, 7
    %v490 = vsub.s32 0, %v489
    %v491 = vrot.slane %v486, %v490
    %v497 = vunpack.c.l.b16 %v482
    %v498 = vunpack.c.l.b16 %v483
    %v499 = vunpack.c.l.b16 %v484
    %v500 = vunpack.c.l.b16 %v485
    %v501 = vpack.c.b16 %v498, %v497
    %v502 = vpack.c.b16 %v500, %v499
    %vm505 = vcmask 261120
    %v507 = vsel %vm505, %v463, 0
    %v510 = vsel %vm505, %v464, 0
    %v513 = vsel %vm505, %v465, 0
    %v516 = vsel %vm505, %v466, 0
    %v519 = vsel %vm505, %v467, 0
    %v522 = vsel %vm505, %v468, 0
    %v525 = vsel %vm505, %v469, 0
    %v528 = vsel %vm505, %v470, 0
    %v531 = vsel %vm505, %v471, 0
    %v534 = vsel %vm505, %v472, 0
    %v537 = vsel %vm505, %v473, 0
    %v540 = vsel %vm505, %v474, 0
    %v543 = vsel %vm505, %v475, 0
    %v546 = vsel %vm505, %v476, 0
    %v549 = vsel %vm505, %v477, 0
    %v552 = vsel %vm505, %v478, 0
    %v555 = vsel %vm505, %v479, 0
    %v558 = vsel %vm505, %v480, 0
    %v561 = vsel %vm505, %v481, 0
    %563 = vmatprep.subr.bf16.mxu0 0
    %564 = vmatpush1.bf16.msra.mxu0 %v501
    %565 = vmatprep.subr.bf16.mxu0 0
    %566 = vmatpush1.bf16.msra.mxu0 %v502
    %567 = vmatprep.subr.bf16.mxu0 0
    %568 = vmatpush1.bf16.msra.mxu0 0
    %569 = vmatprep.subr.bf16.mxu0 0
    %570 = vmatpush1.bf16.msra.mxu0 0
    %571 = vmatprep.subr.bf16.mxu0 0
    %572 = vmatpush1.bf16.msra.mxu0 0
    %573 = vmatprep.subr.bf16.mxu0 0
    %574 = vmatpush1.bf16.msra.mxu0 0
    %575 = vmatprep.subr.bf16.mxu0 0
    %576 = vmatpush1.bf16.msra.mxu0 0
    %577 = vmatprep.subr.bf16.mxu0 0
    %578 = vmatpush1.bf16.msra.mxu0 0
    %579 = vmatprep.subr.bf16.mxu0 0
    %580 = vmatpush1.bf16.msra.mxu0 0
    %581 = vmatprep.subr.bf16.mxu0 0
    %582 = vmatpush1.bf16.msra.mxu0 0
    %583 = vmatprep.subr.bf16.mxu0 0
    %584 = vmatpush1.bf16.msra.mxu0 0
    %585 = vmatprep.subr.bf16.mxu0 0
    %586 = vmatpush1.bf16.msra.mxu0 0
    %587 = vmatprep.subr.bf16.mxu0 0
    %588 = vmatpush1.bf16.msra.mxu0 0
    %589 = vmatprep.subr.bf16.mxu0 0
    %590 = vmatpush1.bf16.msra.mxu0 0
    %591 = vmatprep.subr.bf16.mxu0 0
    %592 = vmatpush1.bf16.msra.mxu0 0
    %593 = vmatprep.subr.bf16.mxu0 0
    %594 = vmatpush1.bf16.msra.mxu0 0
    %595 = vmatprep.mubr.bf16.mxu0 0
    %596 = vmatmul.mubr.bf16.gmra.mrb[0].mxu0 %v507
    %v597 = vpop.f32.mrb[0].mxu0
    %v598 = vadd.f32 %v491, %v597
    %v599 = vpop.f32.mrb[0].mxu0
    %v600 = vpop.f32.mrb[0].mxu0
    %v601 = vadd.f32 %v491, %v600
    %v602 = vpop.f32.mrb[0].mxu0
    %603 = vmatprep.mubr.bf16.mxu0 0
    %604 = vmatmul.mubr.bf16.gmra.mrb[0].mxu0 %v510
    %v605 = vpop.f32.mrb[0].mxu0
    %v606 = vadd.f32 %v491, %v605
    %v607 = vpop.f32.mrb[0].mxu0
    %v608 = vpop.f32.mrb[0].mxu0
    %v609 = vadd.f32 %v491, %v608
    %v610 = vpop.f32.mrb[0].mxu0
    %611 = vmatprep.mubr.bf16.mxu0 0
    %612 = vmatmul.mubr.bf16.gmra.mrb[0].mxu0 %v513
    %v613 = vpop.f32.mrb[0].mxu0
    %v614 = vadd.f32 %v491, %v613
    %v615 = vpop.f32.mrb[0].mxu0
    %v616 = vpop.f32.mrb[0].mxu0
    %v617 = vadd.f32 %v491, %v616
    %v618 = vpop.f32.mrb[0].mxu0
    %619 = vmatprep.mubr.bf16.mxu0 0
    %620 = vmatmul.mubr.bf16.gmra.mrb[0].mxu0 %v516
    %v621 = vpop.f32.mrb[0].mxu0
    %v622 = vadd.f32 %v491, %v621
    %v623 = vpop.f32.mrb[0].mxu0
    %v624 = vpop.f32.mrb[0].mxu0
    %v625 = vadd.f32 %v491, %v624
    %v626 = vpop.f32.mrb[0].mxu0
    %627 = vmatprep.mubr.bf16.mxu0 0
    %628 = vmatmul.mubr.bf16.gmra.mrb[0].mxu0 %v519
    %v629 = vpop.f32.mrb[0].mxu0
    %v630 = vadd.f32 %v491, %v629
    %v631 = vpop.f32.mrb[0].mxu0
    %v632 = vpop.f32.mrb[0].mxu0
    %v633 = vadd.f32 %v491, %v632
    %v634 = vpop.f32.mrb[0].mxu0
    %635 = vmatprep.mubr.bf16.mxu0 0
    %636 = vmatmul.mubr.bf16.gmra.mrb[0].mxu0 %v522
    %v637 = vpop.f32.mrb[0].mxu0
    %v638 = vadd.f32 %v491, %v637
    %v639 = vpop.f32.mrb[0].mxu0
    %v640 = vpop.f32.mrb[0].mxu0
    %v641 = vadd.f32 %v491, %v640
    %v642 = vpop.f32.mrb[0].mxu0
    %643 = vmatprep.mubr.bf16.mxu0 0
    %644 = vmatmul.mubr.bf16.gmra.mrb[0].mxu0 %v525
    %v645 = vpop.f32.mrb[0].mxu0
    %v646 = vadd.f32 %v491, %v645
    %v647 = vpop.f32.mrb[0].mxu0
    %v648 = vpop.f32.mrb[0].mxu0
    %v649 = vadd.f32 %v491, %v648
    %v650 = vpop.f32.mrb[0].mxu0
    %651 = vmatprep.mubr.bf16.mxu0 0
    %652 = vmatmul.mubr.bf16.gmra.mrb[0].mxu0 %v528
    %v653 = vpop.f32.mrb[0].mxu0
    %v654 = vadd.f32 %v491, %v653
    %v655 = vpop.f32.mrb[0].mxu0
    %v656 = vpop.f32.mrb[0].mxu0
    %v657 = vadd.f32 %v491, %v656
    %v658 = vpop.f32.mrb[0].mxu0
    %659 = vmatprep.mubr.bf16.mxu0 0
    %660 = vmatmul.mubr.bf16.gmra.mrb[0].mxu0 %v531
    %v661 = vpop.f32.mrb[0].mxu0
    %v662 = vadd.f32 %v491, %v661
    %v663 = vpop.f32.mrb[0].mxu0
    %v664 = vpop.f32.mrb[0].mxu0
    %v665 = vadd.f32 %v491, %v664
    %v666 = vpop.f32.mrb[0].mxu0
    %667 = vmatprep.mubr.bf16.mxu0 0
    %668 = vmatmul.mubr.bf16.gmra.mrb[0].mxu0 %v534
    %v669 = vpop.f32.mrb[0].mxu0
    %v670 = vadd.f32 %v491, %v669
    %v671 = vpop.f32.mrb[0].mxu0
    %v672 = vpop.f32.mrb[0].mxu0
    %v673 = vadd.f32 %v491, %v672
    %v674 = vpop.f32.mrb[0].mxu0
    %675 = vmatprep.mubr.bf16.mxu0 0
    %676 = vmatmul.mubr.bf16.gmra.mrb[0].mxu0 %v537
    %v677 = vpop.f32.mrb[0].mxu0
    %v678 = vadd.f32 %v491, %v677
    %v679 = vpop.f32.mrb[0].mxu0
    %v680 = vpop.f32.mrb[0].mxu0
    %v681 = vadd.f32 %v491, %v680
    %v682 = vpop.f32.mrb[0].mxu0
    %683 = vmatprep.mubr.bf16.mxu0 0
    %684 = vmatmul.mubr.bf16.gmra.mrb[0].mxu0 %v540
    %v685 = vpop.f32.mrb[0].mxu0
    %v686 = vadd.f32 %v491, %v685
    %v687 = vpop.f32.mrb[0].mxu0
    %v688 = vpop.f32.mrb[0].mxu0
    %v689 = vadd.f32 %v491, %v688
    %v690 = vpop.f32.mrb[0].mxu0
    %691 = vmatprep.mubr.bf16.mxu0 0
    %692 = vmatmul.mubr.bf16.gmra.mrb[0].mxu0 %v543
    %v693 = vpop.f32.mrb[0].mxu0
    %v694 = vadd.f32 %v491, %v693
    %v695 = vpop.f32.mrb[0].mxu0
    %v696 = vpop.f32.mrb[0].mxu0
    %v697 = vadd.f32 %v491, %v696
    %v698 = vpop.f32.mrb[0].mxu0
    %699 = vmatprep.mubr.bf16.mxu0 0
    %700 = vmatmul.mubr.bf16.gmra.mrb[0].mxu0 %v546
    %v701 = vpop.f32.mrb[0].mxu0
    %v702 = vadd.f32 %v491, %v701
    %v703 = vpop.f32.mrb[0].mxu0
    %v704 = vpop.f32.mrb[0].mxu0
    %v705 = vadd.f32 %v491, %v704
    %v706 = vpop.f32.mrb[0].mxu0
    %707 = vmatprep.mubr.bf16.mxu0 0
    %708 = vmatmul.mubr.bf16.gmra.mrb[0].mxu0 %v549
    %v709 = vpop.f32.mrb[0].mxu0
    %v710 = vadd.f32 %v491, %v709
    %v711 = vpop.f32.mrb[0].mxu0
    %v712 = vpop.f32.mrb[0].mxu0
    %v713 = vadd.f32 %v491, %v712
    %v714 = vpop.f32.mrb[0].mxu0
    %715 = vmatprep.mubr.bf16.mxu0 0
    %716 = vmatmul.mubr.bf16.gmra.mrb[0].mxu0 %v552
    %v717 = vpop.f32.mrb[0].mxu0
    %v718 = vadd.f32 %v491, %v717
    %v719 = vpop.f32.mrb[0].mxu0
    %v720 = vpop.f32.mrb[0].mxu0
    %v721 = vadd.f32 %v491, %v720
    %v722 = vpop.f32.mrb[0].mxu0
    %723 = vmatprep.mubr.bf16.mxu0 0
    %724 = vmatmul.mubr.bf16.gmra.mrb[0].mxu0 %v555
    %v725 = vpop.f32.mrb[0].mxu0
    %v726 = vadd.f32 %v491, %v725
    %v727 = vpop.f32.mrb[0].mxu0
    %v728 = vpop.f32.mrb[0].mxu0
    %v729 = vadd.f32 %v491, %v728
    %v730 = vpop.f32.mrb[0].mxu0
    %731 = vmatprep.mubr.bf16.mxu0 0
    %732 = vmatmul.mubr.bf16.gmra.mrb[0].mxu0 %v558
    %v733 = vpop.f32.mrb[0].mxu0
    %v734 = vadd.f32 %v491, %v733
    %v735 = vpop.f32.mrb[0].mxu0
    %v736 = vpop.f32.mrb[0].mxu0
    %v737 = vadd.f32 %v491, %v736
    %v738 = vpop.f32.mrb[0].mxu0
    %739 = vmatprep.mubr.bf16.mxu0 0
    %740 = vmatmul.mubr.bf16.gmra.mrb[0].mxu0 %v561
    %v741 = vpop.f32.mrb[0].mxu0
    %v742 = vadd.f32 %v491, %v741
    %v743 = vpop.f32.mrb[0].mxu0
    %v744 = vpop.f32.mrb[0].mxu0
    %v745 = vadd.f32 %v491, %v744
    %v746 = vpop.f32.mrb[0].mxu0
    %747 = vdwg.mxu0
    %v748 = vmax.f32 %v598, 0.0
    %v749 = vmax.f32 %v601, 0.0
    %v750 = vmax.f32 %v606, 0.0
    %v751 = vmax.f32 %v609, 0.0
    %v752 = vmax.f32 %v614, 0.0
    %v753 = vmax.f32 %v617, 0.0
    %v754 = vmax.f32 %v622, 0.0
    %v755 = vmax.f32 %v625, 0.0
    %v756 = vmax.f32 %v630, 0.0
    %v757 = vmax.f32 %v633, 0.0
    %v758 = vmax.f32 %v638, 0.0
    %v759 = vmax.f32 %v641, 0.0
    %v760 = vmax.f32 %v646, 0.0
    %v761 = vmax.f32 %v649, 0.0
    %v762 = vmax.f32 %v654, 0.0
    %v763 = vmax.f32 %v657, 0.0
    %v764 = vmax.f32 %v662, 0.0
    %v765 = vmax.f32 %v665, 0.0
    %v766 = vmax.f32 %v670, 0.0
    %v767 = vmax.f32 %v673, 0.0
    %v768 = vmax.f32 %v678, 0.0
    %v769 = vmax.f32 %v681, 0.0
    %v770 = vmax.f32 %v686, 0.0
    %v771 = vmax.f32 %v689, 0.0
    %v772 = vmax.f32 %v694, 0.0
    %v773 = vmax.f32 %v697, 0.0
    %v774 = vmax.f32 %v702, 0.0
    %v775 = vmax.f32 %v705, 0.0
    %v776 = vmax.f32 %v710, 0.0
    %v777 = vmax.f32 %v713, 0.0
    %v778 = vmax.f32 %v718, 0.0
    %v779 = vmax.f32 %v721, 0.0
    %v780 = vmax.f32 %v726, 0.0
    %v781 = vmax.f32 %v729, 0.0
    %v782 = vmax.f32 %v734, 0.0
    %v783 = vmax.f32 %v737, 0.0
    %v784 = vmax.f32 %v742, 0.0
    %v785 = vmax.f32 %v745, 0.0
    %v786 = vpack.c.bf16 %v749, %v748
    %v787 = vpack.c.bf16 %v751, %v750
    %v788 = vpack.c.bf16 %v753, %v752
    %v789 = vpack.c.bf16 %v755, %v754
    %v790 = vpack.c.bf16 %v757, %v756
    %v791 = vpack.c.bf16 %v759, %v758
    %v792 = vpack.c.bf16 %v761, %v760
    %v793 = vpack.c.bf16 %v763, %v762
    %v794 = vpack.c.bf16 %v765, %v764
    %v795 = vpack.c.bf16 %v767, %v766
    %v796 = vpack.c.bf16 %v769, %v768
    %v797 = vpack.c.bf16 %v771, %v770
    %v798 = vpack.c.bf16 %v773, %v772
    %v799 = vpack.c.bf16 %v775, %v774
    %v800 = vpack.c.bf16 %v777, %v776
    %v801 = vpack.c.bf16 %v779, %v778
    %v802 = vpack.c.bf16 %v781, %v780
    %v803 = vpack.c.bf16 %v783, %v782
    %v804 = vpack.c.bf16 %v785, %v784
    %v805 = vld [vmem:[%s5] sm:$0xf]
    %v806 = vld [vmem:[%s5 + $0x4] sm:$0xf]
    %v807 = vld [vmem:[%s5 + $0x8] sm:$0xf]
    %v808 = vld [vmem:[%s5 + $0xc] sm:$0xf]
    %v809 = vld [vmem:[%s5 + $0x10] sm:$0xf]
    %v810 = vld [vmem:[%s5 + $0x14] sm:$0xf]
    %v811 = vld [vmem:[%s5 + $0x18] sm:$0xf]
    %v812 = vld [vmem:[%s5 + $0x1c] sm:$0xf]
    %v813 = vld [vmem:[%s6] sm:$0x1]
    %v815 = vlaneseq
    %v816 = vshrl.u32 %v815, 7
    %v817 = vsub.s32 0, %v816
    %v818 = vrot.slane %v813, %v817
    %v828 = vunpack.c.l.b16 %v805
    %v829 = vunpack.c.l.b16 %v806
    %v830 = vunpack.c.l.b16 %v807
    %v831 = vunpack.c.l.b16 %v808
    %v832 = vunpack.c.l.b16 %v809
    %v833 = vunpack.c.l.b16 %v810
    %v834 = vunpack.c.l.b16 %v811
    %v835 = vunpack.c.l.b16 %v812
    %v836 = vpack.c.b16 %v829, %v828
    %v837 = vpack.c.b16 %v831, %v830
    %v838 = vpack.c.b16 %v833, %v832
    %v839 = vpack.c.b16 %v835, %v834
    %vm844 = vcmask 523264
    %v846 = vsel %vm844, %v786, 0
    %v849 = vsel %vm844, %v787, 0
    %v852 = vsel %vm844, %v788, 0
    %v855 = vsel %vm844, %v789, 0
    %v858 = vsel %vm844, %v790, 0
    %v861 = vsel %vm844, %v791, 0
    %v864 = vsel %vm844, %v792, 0
    %v867 = vsel %vm844, %v793, 0
    %v870 = vsel %vm844, %v794, 0
    %v873 = vsel %vm844, %v795, 0
    %v876 = vsel %vm844, %v796, 0
    %v879 = vsel %vm844, %v797, 0
    %v882 = vsel %vm844, %v798, 0
    %v885 = vsel %vm844, %v799, 0
    %v888 = vsel %vm844, %v800, 0
    %v891 = vsel %vm844, %v801, 0
    %v894 = vsel %vm844, %v802, 0
    %v897 = vsel %vm844, %v803, 0
    %v900 = vsel %vm844, %v804, 0
    %902 = vmatprep.subr.bf16.mxu0 0
    %903 = vmatpush1.bf16.msra.mxu0 %v836
    %904 = vmatprep.subr.bf16.mxu0 0
    %905 = vmatpush1.bf16.msra.mxu0 %v837
    %906 = vmatprep.subr.bf16.mxu0 0
    %907 = vmatpush1.bf16.msra.mxu0 %v838
    %908 = vmatprep.subr.bf16.mxu0 0
    %909 = vmatpush1.bf16.msra.mxu0 %v839
    %910 = vmatprep.subr.bf16.mxu0 0
    %911 = vmatpush1.bf16.msra.mxu0 0
    %912 = vmatprep.subr.bf16.mxu0 0
    %913 = vmatpush1.bf16.msra.mxu0 0
    %914 = vmatprep.subr.bf16.mxu0 0
    %915 = vmatpush1.bf16.msra.mxu0 0
    %916 = vmatprep.subr.bf16.mxu0 0
    %917 = vmatpush1.bf16.msra.mxu0 0
    %918 = vmatprep.subr.bf16.mxu0 0
    %919 = vmatpush1.bf16.msra.mxu0 0
    %920 = vmatprep.subr.bf16.mxu0 0
    %921 = vmatpush1.bf16.msra.mxu0 0
    %922 = vmatprep.subr.bf16.mxu0 0
    %923 = vmatpush1.bf16.msra.mxu0 0
    %924 = vmatprep.subr.bf16.mxu0 0
    %925 = vmatpush1.bf16.msra.mxu0 0
    %926 = vmatprep.subr.bf16.mxu0 0
    %927 = vmatpush1.bf16.msra.mxu0 0
    %928 = vmatprep.subr.bf16.mxu0 0
    %929 = vmatpush1.bf16.msra.mxu0 0
    %930 = vmatprep.subr.bf16.mxu0 0
    %931 = vmatpush1.bf16.msra.mxu0 0
    %932 = vmatprep.subr.bf16.mxu0 0
    %933 = vmatpush1.bf16.msra.mxu0 0
    %934 = vmatprep.mubr.bf16.mxu0 0
    %935 = vmatmul.mubr.bf16.gmra.mrb[0].mxu0 %v846
    %v936 = vpop.f32.mrb[0].mxu0
    %v937 = vadd.f32 %v818, %v936
    %v938 = vpop.f32.mrb[0].mxu0
    %v939 = vpop.f32.mrb[0].mxu0
    %v940 = vadd.f32 %v818, %v939
    %v941 = vpop.f32.mrb[0].mxu0
    %942 = vmatprep.mubr.bf16.mxu0 0
    %943 = vmatmul.mubr.bf16.gmra.mrb[0].mxu0 %v849
    %v944 = vpop.f32.mrb[0].mxu0
    %v945 = vadd.f32 %v818, %v944
    %v946 = vpop.f32.mrb[0].mxu0
    %v947 = vpop.f32.mrb[0].mxu0
    %v948 = vadd.f32 %v818, %v947
    %v949 = vpop.f32.mrb[0].mxu0
    %950 = vmatprep.mubr.bf16.mxu0 0
    %951 = vmatmul.mubr.bf16.gmra.mrb[0].mxu0 %v852
    %v952 = vpop.f32.mrb[0].mxu0
    %v953 = vadd.f32 %v818, %v952
    %v954 = vpop.f32.mrb[0].mxu0
    %v955 = vpop.f32.mrb[0].mxu0
    %v956 = vadd.f32 %v818, %v955
    %v957 = vpop.f32.mrb[0].mxu0
    %958 = vmatprep.mubr.bf16.mxu0 0
    %959 = vmatmul.mubr.bf16.gmra.mrb[0].mxu0 %v855
    %v960 = vpop.f32.mrb[0].mxu0
    %v961 = vadd.f32 %v818, %v960
    %v962 = vpop.f32.mrb[0].mxu0
    %v963 = vpop.f32.mrb[0].mxu0
    %v964 = vadd.f32 %v818, %v963
    %v965 = vpop.f32.mrb[0].mxu0
    %966 = vmatprep.mubr.bf16.mxu0 0
    %967 = vmatmul.mubr.bf16.gmra.mrb[0].mxu0 %v858
    %v968 = vpop.f32.mrb[0].mxu0
    %v969 = vadd.f32 %v818, %v968
    %v970 = vpop.f32.mrb[0].mxu0
    %v971 = vpop.f32.mrb[0].mxu0
    %v972 = vadd.f32 %v818, %v971
    %v973 = vpop.f32.mrb[0].mxu0
    %974 = vmatprep.mubr.bf16.mxu0 0
    %975 = vmatmul.mubr.bf16.gmra.mrb[0].mxu0 %v861
    %v976 = vpop.f32.mrb[0].mxu0
    %v977 = vadd.f32 %v818, %v976
    %v978 = vpop.f32.mrb[0].mxu0
    %v979 = vpop.f32.mrb[0].mxu0
    %v980 = vadd.f32 %v818, %v979
    %v981 = vpop.f32.mrb[0].mxu0
    %982 = vmatprep.mubr.bf16.mxu0 0
    %983 = vmatmul.mubr.bf16.gmra.mrb[0].mxu0 %v864
    %v984 = vpop.f32.mrb[0].mxu0
    %v985 = vadd.f32 %v818, %v984
    %v986 = vpop.f32.mrb[0].mxu0
    %v987 = vpop.f32.mrb[0].mxu0
    %v988 = vadd.f32 %v818, %v987
    %v989 = vpop.f32.mrb[0].mxu0
    %990 = vmatprep.mubr.bf16.mxu0 0
    %991 = vmatmul.mubr.bf16.gmra.mrb[0].mxu0 %v867
    %v992 = vpop.f32.mrb[0].mxu0
    %v993 = vadd.f32 %v818, %v992
    %v994 = vpop.f32.mrb[0].mxu0
    %v995 = vpop.f32.mrb[0].mxu0
    %v996 = vadd.f32 %v818, %v995
    %v997 = vpop.f32.mrb[0].mxu0
    %998 = vmatprep.mubr.bf16.mxu0 0
    %999 = vmatmul.mubr.bf16.gmra.mrb[0].mxu0 %v870
    %v1000 = vpop.f32.mrb[0].mxu0
    %v1001 = vadd.f32 %v818, %v1000
    %v1002 = vpop.f32.mrb[0].mxu0
    %v1003 = vpop.f32.mrb[0].mxu0
    %v1004 = vadd.f32 %v818, %v1003
    %v1005 = vpop.f32.mrb[0].mxu0
    %1006 = vmatprep.mubr.bf16.mxu0 0
    %1007 = vmatmul.mubr.bf16.gmra.mrb[0].mxu0 %v873
    %v1008 = vpop.f32.mrb[0].mxu0
    %v1009 = vadd.f32 %v818, %v1008
    %v1010 = vpop.f32.mrb[0].mxu0
    %v1011 = vpop.f32.mrb[0].mxu0
    %v1012 = vadd.f32 %v818, %v1011
    %v1013 = vpop.f32.mrb[0].mxu0
    %1014 = vmatprep.mubr.bf16.mxu0 0
    %1015 = vmatmul.mubr.bf16.gmra.mrb[0].mxu0 %v876
    %v1016 = vpop.f32.mrb[0].mxu0
    %v1017 = vadd.f32 %v818, %v1016
    %v1018 = vpop.f32.mrb[0].mxu0
    %v1019 = vpop.f32.mrb[0].mxu0
    %v1020 = vadd.f32 %v818, %v1019
    %v1021 = vpop.f32.mrb[0].mxu0
    %1022 = vmatprep.mubr.bf16.mxu0 0
    %1023 = vmatmul.mubr.bf16.gmra.mrb[0].mxu0 %v879
    %v1024 = vpop.f32.mrb[0].mxu0
    %v1025 = vadd.f32 %v818, %v1024
    %v1026 = vpop.f32.mrb[0].mxu0
    %v1027 = vpop.f32.mrb[0].mxu0
    %v1028 = vadd.f32 %v818, %v1027
    %v1029 = vpop.f32.mrb[0].mxu0
    %1030 = vmatprep.mubr.bf16.mxu0 0
    %1031 = vmatmul.mubr.bf16.gmra.mrb[0].mxu0 %v882
    %v1032 = vpop.f32.mrb[0].mxu0
    %v1033 = vadd.f32 %v818, %v1032
    %v1034 = vpop.f32.mrb[0].mxu0
    %v1035 = vpop.f32.mrb[0].mxu0
    %v1036 = vadd.f32 %v818, %v1035
    %v1037 = vpop.f32.mrb[0].mxu0
    %1038 = vmatprep.mubr.bf16.mxu0 0
    %1039 = vmatmul.mubr.bf16.gmra.mrb[0].mxu0 %v885
    %v1040 = vpop.f32.mrb[0].mxu0
    %v1041 = vadd.f32 %v818, %v1040
    %v1042 = vpop.f32.mrb[0].mxu0
    %v1043 = vpop.f32.mrb[0].mxu0
    %v1044 = vadd.f32 %v818, %v1043
    %v1045 = vpop.f32.mrb[0].mxu0
    %1046 = vmatprep.mubr.bf16.mxu0 0
    %1047 = vmatmul.mubr.bf16.gmra.mrb[0].mxu0 %v888
    %v1048 = vpop.f32.mrb[0].mxu0
    %v1049 = vadd.f32 %v818, %v1048
    %v1050 = vpop.f32.mrb[0].mxu0
    %v1051 = vpop.f32.mrb[0].mxu0
    %v1052 = vadd.f32 %v818, %v1051
    %v1053 = vpop.f32.mrb[0].mxu0
    %1054 = vmatprep.mubr.bf16.mxu0 0
    %1055 = vmatmul.mubr.bf16.gmra.mrb[0].mxu0 %v891
    %v1056 = vpop.f32.mrb[0].mxu0
    %v1057 = vadd.f32 %v818, %v1056
    %v1058 = vpop.f32.mrb[0].mxu0
    %v1059 = vpop.f32.mrb[0].mxu0
    %v1060 = vadd.f32 %v818, %v1059
    %v1061 = vpop.f32.mrb[0].mxu0
    %1062 = vmatprep.mubr.bf16.mxu0 0
    %1063 = vmatmul.mubr.bf16.gmra.mrb[0].mxu0 %v894
    %v1064 = vpop.f32.mrb[0].mxu0
    %v1065 = vadd.f32 %v818, %v1064
    %v1066 = vpop.f32.mrb[0].mxu0
    %v1067 = vpop.f32.mrb[0].mxu0
    %v1068 = vadd.f32 %v818, %v1067
    %v1069 = vpop.f32.mrb[0].mxu0
    %1070 = vmatprep.mubr.bf16.mxu0 0
    %1071 = vmatmul.mubr.bf16.gmra.mrb[0].mxu0 %v897
    %v1072 = vpop.f32.mrb[0].mxu0
    %v1073 = vadd.f32 %v818, %v1072
    %v1074 = vpop.f32.mrb[0].mxu0
    %v1075 = vpop.f32.mrb[0].mxu0
    %v1076 = vadd.f32 %v818, %v1075
    %v1077 = vpop.f32.mrb[0].mxu0
    %1078 = vmatprep.mubr.bf16.mxu0 0
    %1079 = vmatmul.mubr.bf16.gmra.mrb[0].mxu0 %v900
    %v1080 = vpop.f32.mrb[0].mxu0
    %v1081 = vadd.f32 %v818, %v1080
    %v1082 = vpop.f32.mrb[0].mxu0
    %v1083 = vpop.f32.mrb[0].mxu0
    %v1084 = vadd.f32 %v818, %v1083
    %v1085 = vpop.f32.mrb[0].mxu0
    %1086 = vdwg.mxu0
    %v1087 = vmax.f32 %v937, 0.0
    %v1088 = vmax.f32 %v940, 0.0
    %v1089 = vmax.f32 %v945, 0.0
    %v1090 = vmax.f32 %v948, 0.0
    %v1091 = vmax.f32 %v953, 0.0
    %v1092 = vmax.f32 %v956, 0.0
    %v1093 = vmax.f32 %v961, 0.0
    %v1094 = vmax.f32 %v964, 0.0
    %v1095 = vmax.f32 %v969, 0.0
    %v1096 = vmax.f32 %v972, 0.0
    %v1097 = vmax.f32 %v977, 0.0
    %v1098 = vmax.f32 %v980, 0.0
    %v1099 = vmax.f32 %v985, 0.0
    %v1100 = vmax.f32 %v988, 0.0
    %v1101 = vmax.f32 %v993, 0.0
    %v1102 = vmax.f32 %v996, 0.0
    %v1103 = vmax.f32 %v1001, 0.0
    %v1104 = vmax.f32 %v1004, 0.0
    %v1105 = vmax.f32 %v1009, 0.0
    %v1106 = vmax.f32 %v1012, 0.0
    %v1107 = vmax.f32 %v1017, 0.0
    %v1108 = vmax.f32 %v1020, 0.0
    %v1109 = vmax.f32 %v1025, 0.0
    %v1110 = vmax.f32 %v1028, 0.0
    %v1111 = vmax.f32 %v1033, 0.0
    %v1112 = vmax.f32 %v1036, 0.0
    %v1113 = vmax.f32 %v1041, 0.0
    %v1114 = vmax.f32 %v1044, 0.0
    %v1115 = vmax.f32 %v1049, 0.0
    %v1116 = vmax.f32 %v1052, 0.0
    %v1117 = vmax.f32 %v1057, 0.0
    %v1118 = vmax.f32 %v1060, 0.0
    %v1119 = vmax.f32 %v1065, 0.0
    %v1120 = vmax.f32 %v1068, 0.0
    %v1121 = vmax.f32 %v1073, 0.0
    %v1122 = vmax.f32 %v1076, 0.0
    %v1123 = vmax.f32 %v1081, 0.0
    %v1124 = vmax.f32 %v1084, 0.0
    %v1125 = vpack.c.bf16 %v1088, %v1087
    %v1126 = vpack.c.bf16 %v1090, %v1089
    %v1127 = vpack.c.bf16 %v1092, %v1091
    %v1128 = vpack.c.bf16 %v1094, %v1093
    %v1129 = vpack.c.bf16 %v1096, %v1095
    %v1130 = vpack.c.bf16 %v1098, %v1097
    %v1131 = vpack.c.bf16 %v1100, %v1099
    %v1132 = vpack.c.bf16 %v1102, %v1101
    %v1133 = vpack.c.bf16 %v1104, %v1103
    %v1134 = vpack.c.bf16 %v1106, %v1105
    %v1135 = vpack.c.bf16 %v1108, %v1107
    %v1136 = vpack.c.bf16 %v1110, %v1109
    %v1137 = vpack.c.bf16 %v1112, %v1111
    %v1138 = vpack.c.bf16 %v1114, %v1113
    %v1139 = vpack.c.bf16 %v1116, %v1115
    %v1140 = vpack.c.bf16 %v1118, %v1117
    %v1141 = vpack.c.bf16 %v1120, %v1119
    %v1142 = vpack.c.bf16 %v1122, %v1121
    %v1143 = vpack.c.bf16 %v1124, %v1123
    %v1144 = vld [vmem:[%s7] sm:$0xf]
    %v1145 = vld [vmem:[%s7 + $0x4] sm:$0xf]
    %v1146 = vld [vmem:[%s7 + $0x8] sm:$0xf]
    %v1147 = vld [vmem:[%s7 + $0xc] sm:$0xf]
    %v1148 = vld [vmem:[%s7 + $0x10] sm:$0xf]
    %v1149 = vld [vmem:[%s7 + $0x14] sm:$0xf]
    %v1150 = vld [vmem:[%s7 + $0x18] sm:$0xf]
    %v1151 = vld [vmem:[%s7 + $0x1c] sm:$0xf]
    %v1152 = vld [vmem:[%s7 + $0x20] sm:$0xf]
    %v1153 = vld [vmem:[%s7 + $0x24] sm:$0xf]
    %v1154 = vld [vmem:[%s7 + $0x28] sm:$0xf]
    %v1155 = vld [vmem:[%s7 + $0x2c] sm:$0xf]
    %v1156 = vld [vmem:[%s7 + $0x30] sm:$0xf]
    %v1157 = vld [vmem:[%s7 + $0x34] sm:$0xf]
    %v1158 = vld [vmem:[%s7 + $0x38] sm:$0xf]
    %v1159 = vld [vmem:[%s7 + $0x3c] sm:$0xf]
    %v1160 = vld [vmem:[%s8] sm:$0x1]
    %v1162 = vlaneseq
    %v1163 = vshrl.u32 %v1162, 7
    %v1164 = vsub.s32 0, %v1163
    %v1165 = vrot.slane %v1160, %v1164
    %v1183 = vunpack.c.l.b16 %v1144
    %v1184 = vunpack.c.l.b16 %v1145
    %v1185 = vunpack.c.l.b16 %v1146
    %v1186 = vunpack.c.l.b16 %v1147
    %v1187 = vunpack.c.l.b16 %v1148
    %v1188 = vunpack.c.l.b16 %v1149
    %v1189 = vunpack.c.l.b16 %v1150
    %v1190 = vunpack.c.l.b16 %v1151
    %v1191 = vunpack.c.l.b16 %v1152
    %v1192 = vunpack.c.l.b16 %v1153
    %v1193 = vunpack.c.l.b16 %v1154
    %v1194 = vunpack.c.l.b16 %v1155
    %v1195 = vunpack.c.l.b16 %v1156
    %v1196 = vunpack.c.l.b16 %v1157
    %v1197 = vunpack.c.l.b16 %v1158
    %v1198 = vunpack.c.l.b16 %v1159
    %v1199 = vpack.c.b16 %v1184, %v1183
    %v1200 = vpack.c.b16 %v1186, %v1185
    %v1201 = vpack.c.b16 %v1188, %v1187
    %v1202 = vpack.c.b16 %v1190, %v1189
    %v1203 = vpack.c.b16 %v1192, %v1191
    %v1204 = vpack.c.b16 %v1194, %v1193
    %v1205 = vpack.c.b16 %v1196, %v1195
    %v1206 = vpack.c.b16 %v1198, %v1197
    %1215 = vmatprep.subr.bf16.mxu0 0
    %1216 = vmatpush1.bf16.msra.mxu0 %v1199
    %1217 = vmatprep.subr.bf16.mxu0 0
    %1218 = vmatpush1.bf16.msra.mxu0 %v1200
    %1219 = vmatprep.subr.bf16.mxu0 0
    %1220 = vmatpush1.bf16.msra.mxu0 %v1201
    %1221 = vmatprep.subr.bf16.mxu0 0
    %1222 = vmatpush1.bf16.msra.mxu0 %v1202
    %1223 = vmatprep.subr.bf16.mxu0 0
    %1224 = vmatpush1.bf16.msra.mxu0 %v1203
    %1225 = vmatprep.subr.bf16.mxu0 0
    %1226 = vmatpush1.bf16.msra.mxu0 %v1204
    %1227 = vmatprep.subr.bf16.mxu0 0
    %1228 = vmatpush1.bf16.msra.mxu0 %v1205
    %1229 = vmatprep.subr.bf16.mxu0 0
    %1230 = vmatpush1.bf16.msra.mxu0 %v1206
    %1231 = vmatprep.subr.bf16.mxu0 0
    %1232 = vmatpush1.bf16.msra.mxu0 0
    %1233 = vmatprep.subr.bf16.mxu0 0
    %1234 = vmatpush1.bf16.msra.mxu0 0
    %1235 = vmatprep.subr.bf16.mxu0 0
    %1236 = vmatpush1.bf16.msra.mxu0 0
    %1237 = vmatprep.subr.bf16.mxu0 0
    %1238 = vmatpush1.bf16.msra.mxu0 0
    %1239 = vmatprep.subr.bf16.mxu0 0
    %1240 = vmatpush1.bf16.msra.mxu0 0
    %1241 = vmatprep.subr.bf16.mxu0 0
    %1242 = vmatpush1.bf16.msra.mxu0 0
    %1243 = vmatprep.subr.bf16.mxu0 0
    %1244 = vmatpush1.bf16.msra.mxu0 0
    %1245 = vmatprep.subr.bf16.mxu0 0
    %1246 = vmatpush1.bf16.msra.mxu0 0
    %1247 = vmatprep.mubr.bf16.mxu0 0
    %1248 = vmatmul.mubr.bf16.gmra.mrb[0].mxu0 %v1125
    %v1249 = vpop.f32.mrb[0].mxu0
    %v1250 = vadd.f32 %v1165, %v1249
    %v1251 = vpop.f32.mrb[0].mxu0
    %v1252 = vpop.f32.mrb[0].mxu0
    %v1253 = vadd.f32 %v1165, %v1252
    %v1254 = vpop.f32.mrb[0].mxu0
    %1255 = vmatprep.mubr.bf16.mxu0 0
    %1256 = vmatmul.mubr.bf16.gmra.mrb[0].mxu0 %v1126
    %v1257 = vpop.f32.mrb[0].mxu0
    %v1258 = vadd.f32 %v1165, %v1257
    %v1259 = vpop.f32.mrb[0].mxu0
    %v1260 = vpop.f32.mrb[0].mxu0
    %v1261 = vadd.f32 %v1165, %v1260
    %v1262 = vpop.f32.mrb[0].mxu0
    %1263 = vmatprep.mubr.bf16.mxu0 0
    %1264 = vmatmul.mubr.bf16.gmra.mrb[0].mxu0 %v1127
    %v1265 = vpop.f32.mrb[0].mxu0
    %v1266 = vadd.f32 %v1165, %v1265
    %v1267 = vpop.f32.mrb[0].mxu0
    %v1268 = vpop.f32.mrb[0].mxu0
    %v1269 = vadd.f32 %v1165, %v1268
    %v1270 = vpop.f32.mrb[0].mxu0
    %1271 = vmatprep.mubr.bf16.mxu0 0
    %1272 = vmatmul.mubr.bf16.gmra.mrb[0].mxu0 %v1128
    %v1273 = vpop.f32.mrb[0].mxu0
    %v1274 = vadd.f32 %v1165, %v1273
    %v1275 = vpop.f32.mrb[0].mxu0
    %v1276 = vpop.f32.mrb[0].mxu0
    %v1277 = vadd.f32 %v1165, %v1276
    %v1278 = vpop.f32.mrb[0].mxu0
    %1279 = vmatprep.mubr.bf16.mxu0 0
    %1280 = vmatmul.mubr.bf16.gmra.mrb[0].mxu0 %v1129
    %v1281 = vpop.f32.mrb[0].mxu0
    %v1282 = vadd.f32 %v1165, %v1281
    %v1283 = vpop.f32.mrb[0].mxu0
    %v1284 = vpop.f32.mrb[0].mxu0
    %v1285 = vadd.f32 %v1165, %v1284
    %v1286 = vpop.f32.mrb[0].mxu0
    %1287 = vmatprep.mubr.bf16.mxu0 0
    %1288 = vmatmul.mubr.bf16.gmra.mrb[0].mxu0 %v1130
    %v1289 = vpop.f32.mrb[0].mxu0
    %v1290 = vadd.f32 %v1165, %v1289
    %v1291 = vpop.f32.mrb[0].mxu0
    %v1292 = vpop.f32.mrb[0].mxu0
    %v1293 = vadd.f32 %v1165, %v1292
    %v1294 = vpop.f32.mrb[0].mxu0
    %1295 = vmatprep.mubr.bf16.mxu0 0
    %1296 = vmatmul.mubr.bf16.gmra.mrb[0].mxu0 %v1131
    %v1297 = vpop.f32.mrb[0].mxu0
    %v1298 = vadd.f32 %v1165, %v1297
    %v1299 = vpop.f32.mrb[0].mxu0
    %v1300 = vpop.f32.mrb[0].mxu0
    %v1301 = vadd.f32 %v1165, %v1300
    %v1302 = vpop.f32.mrb[0].mxu0
    %1303 = vmatprep.mubr.bf16.mxu0 0
    %1304 = vmatmul.mubr.bf16.gmra.mrb[0].mxu0 %v1132
    %v1305 = vpop.f32.mrb[0].mxu0
    %v1306 = vadd.f32 %v1165, %v1305
    %v1307 = vpop.f32.mrb[0].mxu0
    %v1308 = vpop.f32.mrb[0].mxu0
    %v1309 = vadd.f32 %v1165, %v1308
    %v1310 = vpop.f32.mrb[0].mxu0
    %1311 = vmatprep.mubr.bf16.mxu0 0
    %1312 = vmatmul.mubr.bf16.gmra.mrb[0].mxu0 %v1133
    %v1313 = vpop.f32.mrb[0].mxu0
    %v1314 = vadd.f32 %v1165, %v1313
    %v1315 = vpop.f32.mrb[0].mxu0
    %v1316 = vpop.f32.mrb[0].mxu0
    %v1317 = vadd.f32 %v1165, %v1316
    %v1318 = vpop.f32.mrb[0].mxu0
    %1319 = vmatprep.mubr.bf16.mxu0 0
    %1320 = vmatmul.mubr.bf16.gmra.mrb[0].mxu0 %v1134
    %v1321 = vpop.f32.mrb[0].mxu0
    %v1322 = vadd.f32 %v1165, %v1321
    %v1323 = vpop.f32.mrb[0].mxu0
    %v1324 = vpop.f32.mrb[0].mxu0
    %v1325 = vadd.f32 %v1165, %v1324
    %v1326 = vpop.f32.mrb[0].mxu0
    %1327 = vmatprep.mubr.bf16.mxu0 0
    %1328 = vmatmul.mubr.bf16.gmra.mrb[0].mxu0 %v1135
    %v1329 = vpop.f32.mrb[0].mxu0
    %v1330 = vadd.f32 %v1165, %v1329
    %v1331 = vpop.f32.mrb[0].mxu0
    %v1332 = vpop.f32.mrb[0].mxu0
    %v1333 = vadd.f32 %v1165, %v1332
    %v1334 = vpop.f32.mrb[0].mxu0
    %1335 = vmatprep.mubr.bf16.mxu0 0
    %1336 = vmatmul.mubr.bf16.gmra.mrb[0].mxu0 %v1136
    %v1337 = vpop.f32.mrb[0].mxu0
    %v1338 = vadd.f32 %v1165, %v1337
    %v1339 = vpop.f32.mrb[0].mxu0
    %v1340 = vpop.f32.mrb[0].mxu0
    %v1341 = vadd.f32 %v1165, %v1340
    %v1342 = vpop.f32.mrb[0].mxu0
    %1343 = vmatprep.mubr.bf16.mxu0 0
    %1344 = vmatmul.mubr.bf16.gmra.mrb[0].mxu0 %v1137
    %v1345 = vpop.f32.mrb[0].mxu0
    %v1346 = vadd.f32 %v1165, %v1345
    %v1347 = vpop.f32.mrb[0].mxu0
    %v1348 = vpop.f32.mrb[0].mxu0
    %v1349 = vadd.f32 %v1165, %v1348
    %v1350 = vpop.f32.mrb[0].mxu0
    %1351 = vmatprep.mubr.bf16.mxu0 0
    %1352 = vmatmul.mubr.bf16.gmra.mrb[0].mxu0 %v1138
    %v1353 = vpop.f32.mrb[0].mxu0
    %v1354 = vadd.f32 %v1165, %v1353
    %v1355 = vpop.f32.mrb[0].mxu0
    %v1356 = vpop.f32.mrb[0].mxu0
    %v1357 = vadd.f32 %v1165, %v1356
    %v1358 = vpop.f32.mrb[0].mxu0
    %1359 = vmatprep.mubr.bf16.mxu0 0
    %1360 = vmatmul.mubr.bf16.gmra.mrb[0].mxu0 %v1139
    %v1361 = vpop.f32.mrb[0].mxu0
    %v1362 = vadd.f32 %v1165, %v1361
    %v1363 = vpop.f32.mrb[0].mxu0
    %v1364 = vpop.f32.mrb[0].mxu0
    %v1365 = vadd.f32 %v1165, %v1364
    %v1366 = vpop.f32.mrb[0].mxu0
    %1367 = vmatprep.mubr.bf16.mxu0 0
    %1368 = vmatmul.mubr.bf16.gmra.mrb[0].mxu0 %v1140
    %v1369 = vpop.f32.mrb[0].mxu0
    %v1370 = vadd.f32 %v1165, %v1369
    %v1371 = vpop.f32.mrb[0].mxu0
    %v1372 = vpop.f32.mrb[0].mxu0
    %v1373 = vadd.f32 %v1165, %v1372
    %v1374 = vpop.f32.mrb[0].mxu0
    %1375 = vmatprep.mubr.bf16.mxu0 0
    %1376 = vmatmul.mubr.bf16.gmra.mrb[0].mxu0 %v1141
    %v1377 = vpop.f32.mrb[0].mxu0
    %v1378 = vadd.f32 %v1165, %v1377
    %v1379 = vpop.f32.mrb[0].mxu0
    %v1380 = vpop.f32.mrb[0].mxu0
    %v1381 = vadd.f32 %v1165, %v1380
    %v1382 = vpop.f32.mrb[0].mxu0
    %1383 = vmatprep.mubr.bf16.mxu0 0
    %1384 = vmatmul.mubr.bf16.gmra.mrb[0].mxu0 %v1142
    %v1385 = vpop.f32.mrb[0].mxu0
    %v1386 = vadd.f32 %v1165, %v1385
    %v1387 = vpop.f32.mrb[0].mxu0
    %v1388 = vpop.f32.mrb[0].mxu0
    %v1389 = vadd.f32 %v1165, %v1388
    %v1390 = vpop.f32.mrb[0].mxu0
    %1391 = vmatprep.mubr.bf16.mxu0 0
    %1392 = vmatmul.mubr.bf16.gmra.mrb[0].mxu0 %v1143
    %v1393 = vpop.f32.mrb[0].mxu0
    %v1394 = vadd.f32 %v1165, %v1393
    %v1395 = vpop.f32.mrb[0].mxu0
    %v1396 = vpop.f32.mrb[0].mxu0
    %v1397 = vadd.f32 %v1165, %v1396
    %v1398 = vpop.f32.mrb[0].mxu0
    %1399 = vdwg.mxu0
    %1400 = vmax.xlane.f32.xlu0 %v1250
    %v1401 = vpop.xlane.xlu0 %1400
    %1402 = vmax.xlane.f32.xlu0 %v1253
    %v1403 = vpop.xlane.xlu0 %1402
    %1404 = vmax.xlane.f32.xlu0 %v1258
    %v1405 = vpop.xlane.xlu0 %1404
    %1406 = vmax.xlane.f32.xlu0 %v1261
    %v1407 = vpop.xlane.xlu0 %1406
    %1408 = vmax.xlane.f32.xlu0 %v1266
    %v1409 = vpop.xlane.xlu0 %1408
    %1410 = vmax.xlane.f32.xlu0 %v1269
    %v1411 = vpop.xlane.xlu0 %1410
    %1412 = vmax.xlane.f32.xlu0 %v1274
    %v1413 = vpop.xlane.xlu0 %1412
    %1414 = vmax.xlane.f32.xlu0 %v1277
    %v1415 = vpop.xlane.xlu0 %1414
    %1416 = vmax.xlane.f32.xlu0 %v1282
    %v1417 = vpop.xlane.xlu0 %1416
    %1418 = vmax.xlane.f32.xlu0 %v1285
    %v1419 = vpop.xlane.xlu0 %1418
    %1420 = vmax.xlane.f32.xlu0 %v1290
    %v1421 = vpop.xlane.xlu0 %1420
    %1422 = vmax.xlane.f32.xlu0 %v1293
    %v1423 = vpop.xlane.xlu0 %1422
    %1424 = vmax.xlane.f32.xlu0 %v1298
    %v1425 = vpop.xlane.xlu0 %1424
    %1426 = vmax.xlane.f32.xlu0 %v1301
    %v1427 = vpop.xlane.xlu0 %1426
    %1428 = vmax.xlane.f32.xlu0 %v1306
    %v1429 = vpop.xlane.xlu0 %1428
    %1430 = vmax.xlane.f32.xlu0 %v1309
    %v1431 = vpop.xlane.xlu0 %1430
    %1432 = vmax.xlane.f32.xlu0 %v1314
    %v1433 = vpop.xlane.xlu0 %1432
    %1434 = vmax.xlane.f32.xlu0 %v1317
    %v1435 = vpop.xlane.xlu0 %1434
    %1436 = vmax.xlane.f32.xlu0 %v1322
    %v1437 = vpop.xlane.xlu0 %1436
    %1438 = vmax.xlane.f32.xlu0 %v1325
    %v1439 = vpop.xlane.xlu0 %1438
    %1440 = vmax.xlane.f32.xlu0 %v1330
    %v1441 = vpop.xlane.xlu0 %1440
    %1442 = vmax.xlane.f32.xlu0 %v1333
    %v1443 = vpop.xlane.xlu0 %1442
    %1444 = vmax.xlane.f32.xlu0 %v1338
    %v1445 = vpop.xlane.xlu0 %1444
    %1446 = vmax.xlane.f32.xlu0 %v1341
    %v1447 = vpop.xlane.xlu0 %1446
    %1448 = vmax.xlane.f32.xlu0 %v1346
    %v1449 = vpop.xlane.xlu0 %1448
    %1450 = vmax.xlane.f32.xlu0 %v1349
    %v1451 = vpop.xlane.xlu0 %1450
    %1452 = vmax.xlane.f32.xlu0 %v1354
    %v1453 = vpop.xlane.xlu0 %1452
    %1454 = vmax.xlane.f32.xlu0 %v1357
    %v1455 = vpop.xlane.xlu0 %1454
    %1456 = vmax.xlane.f32.xlu0 %v1362
    %v1457 = vpop.xlane.xlu0 %1456
    %1458 = vmax.xlane.f32.xlu0 %v1365
    %v1459 = vpop.xlane.xlu0 %1458
    %1460 = vmax.xlane.f32.xlu0 %v1370
    %v1461 = vpop.xlane.xlu0 %1460
    %1462 = vmax.xlane.f32.xlu0 %v1373
    %v1463 = vpop.xlane.xlu0 %1462
    %1464 = vmax.xlane.f32.xlu0 %v1378
    %v1465 = vpop.xlane.xlu0 %1464
    %1466 = vmax.xlane.f32.xlu0 %v1381
    %v1467 = vpop.xlane.xlu0 %1466
    %1468 = vmax.xlane.f32.xlu0 %v1386
    %v1469 = vpop.xlane.xlu0 %1468
    %1470 = vmax.xlane.f32.xlu0 %v1389
    %v1471 = vpop.xlane.xlu0 %1470
    %1472 = vmax.xlane.f32.xlu0 %v1394
    %v1473 = vpop.xlane.xlu0 %1472
    %1474 = vmax.xlane.f32.xlu0 %v1397
    %v1475 = vpop.xlane.xlu0 %1474
    %v1476 = vsub.f32 %v1250, %v1401
    %v1477 = vsub.f32 %v1253, %v1403
    %v1478 = vsub.f32 %v1258, %v1405
    %v1479 = vsub.f32 %v1261, %v1407
    %v1480 = vsub.f32 %v1266, %v1409
    %v1481 = vsub.f32 %v1269, %v1411
    %v1482 = vsub.f32 %v1274, %v1413
    %v1483 = vsub.f32 %v1277, %v1415
    %v1484 = vsub.f32 %v1282, %v1417
    %v1485 = vsub.f32 %v1285, %v1419
    %v1486 = vsub.f32 %v1290, %v1421
    %v1487 = vsub.f32 %v1293, %v1423
    %v1488 = vsub.f32 %v1298, %v1425
    %v1489 = vsub.f32 %v1301, %v1427
    %v1490 = vsub.f32 %v1306, %v1429
    %v1491 = vsub.f32 %v1309, %v1431
    %v1492 = vsub.f32 %v1314, %v1433
    %v1493 = vsub.f32 %v1317, %v1435
    %v1494 = vsub.f32 %v1322, %v1437
    %v1495 = vsub.f32 %v1325, %v1439
    %v1496 = vsub.f32 %v1330, %v1441
    %v1497 = vsub.f32 %v1333, %v1443
    %v1498 = vsub.f32 %v1338, %v1445
    %v1499 = vsub.f32 %v1341, %v1447
    %v1500 = vsub.f32 %v1346, %v1449
    %v1501 = vsub.f32 %v1349, %v1451
    %v1502 = vsub.f32 %v1354, %v1453
    %v1503 = vsub.f32 %v1357, %v1455
    %v1504 = vsub.f32 %v1362, %v1457
    %v1505 = vsub.f32 %v1365, %v1459
    %v1506 = vsub.f32 %v1370, %v1461
    %v1507 = vsub.f32 %v1373, %v1463
    %v1508 = vsub.f32 %v1378, %v1465
    %v1509 = vsub.f32 %v1381, %v1467
    %v1510 = vsub.f32 %v1386, %v1469
    %v1511 = vsub.f32 %v1389, %v1471
    %v1512 = vsub.f32 %v1394, %v1473
    %v1513 = vsub.f32 %v1397, %v1475
    %v1514 = vmul.f32 %v1476, 1.442695
    %v1515 = vpow.pop %v1514
    %v1516 = vmul.f32 %v1477, 1.442695
    %v1517 = vpow.pop %v1516
    %v1518 = vmul.f32 %v1478, 1.442695
    %v1519 = vpow.pop %v1518
    %v1520 = vmul.f32 %v1479, 1.442695
    %v1521 = vpow.pop %v1520
    %v1522 = vmul.f32 %v1480, 1.442695
    %v1523 = vpow.pop %v1522
    %v1524 = vmul.f32 %v1481, 1.442695
    %v1525 = vpow.pop %v1524
    %v1526 = vmul.f32 %v1482, 1.442695
    %v1527 = vpow.pop %v1526
    %v1528 = vmul.f32 %v1483, 1.442695
    %v1529 = vpow.pop %v1528
    %v1530 = vmul.f32 %v1484, 1.442695
    %v1531 = vpow.pop %v1530
    %v1532 = vmul.f32 %v1485, 1.442695
    %v1533 = vpow.pop %v1532
    %v1534 = vmul.f32 %v1486, 1.442695
    %v1535 = vpow.pop %v1534
    %v1536 = vmul.f32 %v1487, 1.442695
    %v1537 = vpow.pop %v1536
    %v1538 = vmul.f32 %v1488, 1.442695
    %v1539 = vpow.pop %v1538
    %v1540 = vmul.f32 %v1489, 1.442695
    %v1541 = vpow.pop %v1540
    %v1542 = vmul.f32 %v1490, 1.442695
    %v1543 = vpow.pop %v1542
    %v1544 = vmul.f32 %v1491, 1.442695
    %v1545 = vpow.pop %v1544
    %v1546 = vmul.f32 %v1492, 1.442695
    %v1547 = vpow.pop %v1546
    %v1548 = vmul.f32 %v1493, 1.442695
    %v1549 = vpow.pop %v1548
    %v1550 = vmul.f32 %v1494, 1.442695
    %v1551 = vpow.pop %v1550
    %v1552 = vmul.f32 %v1495, 1.442695
    %v1553 = vpow.pop %v1552
    %v1554 = vmul.f32 %v1496, 1.442695
    %v1555 = vpow.pop %v1554
    %v1556 = vmul.f32 %v1497, 1.442695
    %v1557 = vpow.pop %v1556
    %v1558 = vmul.f32 %v1498, 1.442695
    %v1559 = vpow.pop %v1558
    %v1560 = vmul.f32 %v1499, 1.442695
    %v1561 = vpow.pop %v1560
    %v1562 = vmul.f32 %v1500, 1.442695
    %v1563 = vpow.pop %v1562
    %v1564 = vmul.f32 %v1501, 1.442695
    %v1565 = vpow.pop %v1564
    %v1566 = vmul.f32 %v1502, 1.442695
    %v1567 = vpow.pop %v1566
    %v1568 = vmul.f32 %v1503, 1.442695
    %v1569 = vpow.pop %v1568
    %v1570 = vmul.f32 %v1504, 1.442695
    %v1571 = vpow.pop %v1570
    %v1572 = vmul.f32 %v1505, 1.442695
    %v1573 = vpow.pop %v1572
    %v1574 = vmul.f32 %v1506, 1.442695
    %v1575 = vpow.pop %v1574
    %v1576 = vmul.f32 %v1507, 1.442695
    %v1577 = vpow.pop %v1576
    %v1578 = vmul.f32 %v1508, 1.442695
    %v1579 = vpow.pop %v1578
    %v1580 = vmul.f32 %v1509, 1.442695
    %v1581 = vpow.pop %v1580
    %v1582 = vmul.f32 %v1510, 1.442695
    %v1583 = vpow.pop %v1582
    %v1584 = vmul.f32 %v1511, 1.442695
    %v1585 = vpow.pop %v1584
    %v1586 = vmul.f32 %v1512, 1.442695
    %v1587 = vpow.pop %v1586
    %v1588 = vmul.f32 %v1513, 1.442695
    %v1589 = vpow.pop %v1588
    %1590 = vadd.xlane.f32.xlu0 %v1515
    %v1591 = vpop.xlane.xlu0 %1590
    %1592 = vadd.xlane.f32.xlu0 %v1517
    %v1593 = vpop.xlane.xlu0 %1592
    %1594 = vadd.xlane.f32.xlu0 %v1519
    %v1595 = vpop.xlane.xlu0 %1594
    %1596 = vadd.xlane.f32.xlu0 %v1521
    %v1597 = vpop.xlane.xlu0 %1596
    %1598 = vadd.xlane.f32.xlu0 %v1523
    %v1599 = vpop.xlane.xlu0 %1598
    %1600 = vadd.xlane.f32.xlu0 %v1525
    %v1601 = vpop.xlane.xlu0 %1600
    %1602 = vadd.xlane.f32.xlu0 %v1527
    %v1603 = vpop.xlane.xlu0 %1602
    %1604 = vadd.xlane.f32.xlu0 %v1529
    %v1605 = vpop.xlane.xlu0 %1604
    %1606 = vadd.xlane.f32.xlu0 %v1531
    %v1607 = vpop.xlane.xlu0 %1606
    %1608 = vadd.xlane.f32.xlu0 %v1533
    %v1609 = vpop.xlane.xlu0 %1608
    %1610 = vadd.xlane.f32.xlu0 %v1535
    %v1611 = vpop.xlane.xlu0 %1610
    %1612 = vadd.xlane.f32.xlu0 %v1537
    %v1613 = vpop.xlane.xlu0 %1612
    %1614 = vadd.xlane.f32.xlu0 %v1539
    %v1615 = vpop.xlane.xlu0 %1614
    %1616 = vadd.xlane.f32.xlu0 %v1541
    %v1617 = vpop.xlane.xlu0 %1616
    %1618 = vadd.xlane.f32.xlu0 %v1543
    %v1619 = vpop.xlane.xlu0 %1618
    %1620 = vadd.xlane.f32.xlu0 %v1545
    %v1621 = vpop.xlane.xlu0 %1620
    %1622 = vadd.xlane.f32.xlu0 %v1547
    %v1623 = vpop.xlane.xlu0 %1622
    %1624 = vadd.xlane.f32.xlu0 %v1549
    %v1625 = vpop.xlane.xlu0 %1624
    %1626 = vadd.xlane.f32.xlu0 %v1551
    %v1627 = vpop.xlane.xlu0 %1626
    %1628 = vadd.xlane.f32.xlu0 %v1553
    %v1629 = vpop.xlane.xlu0 %1628
    %1630 = vadd.xlane.f32.xlu0 %v1555
    %v1631 = vpop.xlane.xlu0 %1630
    %1632 = vadd.xlane.f32.xlu0 %v1557
    %v1633 = vpop.xlane.xlu0 %1632
    %1634 = vadd.xlane.f32.xlu0 %v1559
    %v1635 = vpop.xlane.xlu0 %1634
    %1636 = vadd.xlane.f32.xlu0 %v1561
    %v1637 = vpop.xlane.xlu0 %1636
    %1638 = vadd.xlane.f32.xlu0 %v1563
    %v1639 = vpop.xlane.xlu0 %1638
    %1640 = vadd.xlane.f32.xlu0 %v1565
    %v1641 = vpop.xlane.xlu0 %1640
    %1642 = vadd.xlane.f32.xlu0 %v1567
    %v1643 = vpop.xlane.xlu0 %1642
    %1644 = vadd.xlane.f32.xlu0 %v1569
    %v1645 = vpop.xlane.xlu0 %1644
    %1646 = vadd.xlane.f32.xlu0 %v1571
    %v1647 = vpop.xlane.xlu0 %1646
    %1648 = vadd.xlane.f32.xlu0 %v1573
    %v1649 = vpop.xlane.xlu0 %1648
    %1650 = vadd.xlane.f32.xlu0 %v1575
    %v1651 = vpop.xlane.xlu0 %1650
    %1652 = vadd.xlane.f32.xlu0 %v1577
    %v1653 = vpop.xlane.xlu0 %1652
    %1654 = vadd.xlane.f32.xlu0 %v1579
    %v1655 = vpop.xlane.xlu0 %1654
    %1656 = vadd.xlane.f32.xlu0 %v1581
    %v1657 = vpop.xlane.xlu0 %1656
    %1658 = vadd.xlane.f32.xlu0 %v1583
    %v1659 = vpop.xlane.xlu0 %1658
    %1660 = vadd.xlane.f32.xlu0 %v1585
    %v1661 = vpop.xlane.xlu0 %1660
    %1662 = vadd.xlane.f32.xlu0 %v1587
    %v1663 = vpop.xlane.xlu0 %1662
    %1664 = vadd.xlane.f32.xlu0 %v1589
    %v1665 = vpop.xlane.xlu0 %1664
    %v1666 = vrcp.pop %v1591
    %v1667 = vrcp.pop %v1593
    %v1668 = vrcp.pop %v1595
    %v1669 = vrcp.pop %v1597
    %v1670 = vrcp.pop %v1599
    %v1671 = vrcp.pop %v1601
    %v1672 = vrcp.pop %v1603
    %v1673 = vrcp.pop %v1605
    %v1674 = vrcp.pop %v1607
    %v1675 = vrcp.pop %v1609
    %v1676 = vrcp.pop %v1611
    %v1677 = vrcp.pop %v1613
    %v1678 = vrcp.pop %v1615
    %v1679 = vrcp.pop %v1617
    %v1680 = vrcp.pop %v1619
    %v1681 = vrcp.pop %v1621
    %v1682 = vrcp.pop %v1623
    %v1683 = vrcp.pop %v1625
    %v1684 = vrcp.pop %v1627
    %v1685 = vrcp.pop %v1629
    %v1686 = vrcp.pop %v1631
    %v1687 = vrcp.pop %v1633
    %v1688 = vrcp.pop %v1635
    %v1689 = vrcp.pop %v1637
    %v1690 = vrcp.pop %v1639
    %v1691 = vrcp.pop %v1641
    %v1692 = vrcp.pop %v1643
    %v1693 = vrcp.pop %v1645
    %v1694 = vrcp.pop %v1647
    %v1695 = vrcp.pop %v1649
    %v1696 = vrcp.pop %v1651
    %v1697 = vrcp.pop %v1653
    %v1698 = vrcp.pop %v1655
    %v1699 = vrcp.pop %v1657
    %v1700 = vrcp.pop %v1659
    %v1701 = vrcp.pop %v1661
    %v1702 = vrcp.pop %v1663
    %v1703 = vrcp.pop %v1665
    %v1704 = vmul.f32 %v1515, %v1666
    %v1705 = vmul.f32 %v1517, %v1667
    %v1706 = vmul.f32 %v1519, %v1668
    %v1707 = vmul.f32 %v1521, %v1669
    %v1708 = vmul.f32 %v1523, %v1670
    %v1709 = vmul.f32 %v1525, %v1671
    %v1710 = vmul.f32 %v1527, %v1672
    %v1711 = vmul.f32 %v1529, %v1673
    %v1712 = vmul.f32 %v1531, %v1674
    %v1713 = vmul.f32 %v1533, %v1675
    %v1714 = vmul.f32 %v1535, %v1676
    %v1715 = vmul.f32 %v1537, %v1677
    %v1716 = vmul.f32 %v1539, %v1678
    %v1717 = vmul.f32 %v1541, %v1679
    %v1718 = vmul.f32 %v1543, %v1680
    %v1719 = vmul.f32 %v1545, %v1681
    %v1720 = vmul.f32 %v1547, %v1682
    %v1721 = vmul.f32 %v1549, %v1683
    %v1722 = vmul.f32 %v1551, %v1684
    %v1723 = vmul.f32 %v1553, %v1685
    %v1724 = vmul.f32 %v1555, %v1686
    %v1725 = vmul.f32 %v1557, %v1687
    %v1726 = vmul.f32 %v1559, %v1688
    %v1727 = vmul.f32 %v1561, %v1689
    %v1728 = vmul.f32 %v1563, %v1690
    %v1729 = vmul.f32 %v1565, %v1691
    %v1730 = vmul.f32 %v1567, %v1692
    %v1731 = vmul.f32 %v1569, %v1693
    %v1732 = vmul.f32 %v1571, %v1694
    %v1733 = vmul.f32 %v1573, %v1695
    %v1734 = vmul.f32 %v1575, %v1696
    %v1735 = vmul.f32 %v1577, %v1697
    %v1736 = vmul.f32 %v1579, %v1698
    %v1737 = vmul.f32 %v1581, %v1699
    %v1738 = vmul.f32 %v1583, %v1700
    %v1739 = vmul.f32 %v1585, %v1701
    %v1740 = vmul.f32 %v1587, %v1702
    %v1741 = vmul.f32 %v1589, %v1703
    %v1742 = vpack.c.bf16 %v1705, %v1704
    %v1743 = vpack.c.bf16 %v1707, %v1706
    %v1744 = vpack.c.bf16 %v1709, %v1708
    %v1745 = vpack.c.bf16 %v1711, %v1710
    %v1746 = vpack.c.bf16 %v1713, %v1712
    %v1747 = vpack.c.bf16 %v1715, %v1714
    %v1748 = vpack.c.bf16 %v1717, %v1716
    %v1749 = vpack.c.bf16 %v1719, %v1718
    %v1750 = vpack.c.bf16 %v1721, %v1720
    %v1751 = vpack.c.bf16 %v1723, %v1722
    %v1752 = vpack.c.bf16 %v1725, %v1724
    %v1753 = vpack.c.bf16 %v1727, %v1726
    %v1754 = vpack.c.bf16 %v1729, %v1728
    %v1755 = vpack.c.bf16 %v1731, %v1730
    %v1756 = vpack.c.bf16 %v1733, %v1732
    %v1757 = vpack.c.bf16 %v1735, %v1734
    %v1758 = vpack.c.bf16 %v1737, %v1736
    %v1759 = vpack.c.bf16 %v1739, %v1738
    %v1760 = vpack.c.bf16 %v1741, %v1740
    %v1780 = vunpack.c.l.b16 %v1742
    %v1781 = vunpack.c.h.b16 %v1742
    %v1782 = vunpack.c.l.b16 %v1743
    %v1783 = vunpack.c.h.b16 %v1743
    %v1784 = vunpack.c.l.b16 %v1744
    %v1785 = vunpack.c.h.b16 %v1744
    %v1786 = vunpack.c.l.b16 %v1745
    %v1787 = vunpack.c.h.b16 %v1745
    %v1788 = vunpack.c.l.b16 %v1746
    %v1789 = vunpack.c.h.b16 %v1746
    %v1790 = vunpack.c.l.b16 %v1747
    %v1791 = vunpack.c.h.b16 %v1747
    %v1792 = vunpack.c.l.b16 %v1748
    %v1793 = vunpack.c.h.b16 %v1748
    %v1794 = vunpack.c.l.b16 %v1749
    %v1795 = vunpack.c.h.b16 %v1749
    %v1796 = vunpack.c.l.b16 %v1750
    %v1797 = vunpack.c.h.b16 %v1750
    %v1798 = vunpack.c.l.b16 %v1751
    %v1799 = vunpack.c.h.b16 %v1751
    %v1800 = vunpack.c.l.b16 %v1752
    %v1801 = vunpack.c.h.b16 %v1752
    %v1802 = vunpack.c.l.b16 %v1753
    %v1803 = vunpack.c.h.b16 %v1753
    %v1804 = vunpack.c.l.b16 %v1754
    %v1805 = vunpack.c.h.b16 %v1754
    %v1806 = vunpack.c.l.b16 %v1755
    %v1807 = vunpack.c.h.b16 %v1755
    %v1808 = vunpack.c.l.b16 %v1756
    %v1809 = vunpack.c.h.b16 %v1756
    %v1810 = vunpack.c.l.b16 %v1757
    %v1811 = vunpack.c.h.b16 %v1757
    %v1812 = vunpack.c.l.b16 %v1758
    %v1813 = vunpack.c.h.b16 %v1758
    %v1814 = vunpack.c.l.b16 %v1759
    %v1815 = vunpack.c.h.b16 %v1759
    %v1816 = vunpack.c.l.b16 %v1760
    %v1817 = vunpack.c.h.b16 %v1760
    %v1818 = vpack.c.b16 %v1780, %v1780
    %v1819 = vpack.c.b16 %v1781, %v1781
    %v1820 = vpack.c.b16 %v1782, %v1782
    %v1821 = vpack.c.b16 %v1783, %v1783
    %v1822 = vpack.c.b16 %v1784, %v1784
    %v1823 = vpack.c.b16 %v1785, %v1785
    %v1824 = vpack.c.b16 %v1786, %v1786
    %v1825 = vpack.c.b16 %v1787, %v1787
    %v1826 = vpack.c.b16 %v1788, %v1788
    %v1827 = vpack.c.b16 %v1789, %v1789
    %v1828 = vpack.c.b16 %v1790, %v1790
    %v1829 = vpack.c.b16 %v1791, %v1791
    %v1830 = vpack.c.b16 %v1792, %v1792
    %v1831 = vpack.c.b16 %v1793, %v1793
    %v1832 = vpack.c.b16 %v1794, %v1794
    %v1833 = vpack.c.b16 %v1795, %v1795
    %v1834 = vpack.c.b16 %v1796, %v1796
    %v1835 = vpack.c.b16 %v1797, %v1797
    %v1836 = vpack.c.b16 %v1798, %v1798
    %v1837 = vpack.c.b16 %v1799, %v1799
    %v1838 = vpack.c.b16 %v1800, %v1800
    %v1839 = vpack.c.b16 %v1801, %v1801
    %v1840 = vpack.c.b16 %v1802, %v1802
    %v1841 = vpack.c.b16 %v1803, %v1803
    %v1842 = vpack.c.b16 %v1804, %v1804
    %v1843 = vpack.c.b16 %v1805, %v1805
    %v1844 = vpack.c.b16 %v1806, %v1806
    %v1845 = vpack.c.b16 %v1807, %v1807
    %v1846 = vpack.c.b16 %v1808, %v1808
    %v1847 = vpack.c.b16 %v1809, %v1809
    %v1848 = vpack.c.b16 %v1810, %v1810
    %v1849 = vpack.c.b16 %v1811, %v1811
    %v1850 = vpack.c.b16 %v1812, %v1812
    %v1851 = vpack.c.b16 %v1813, %v1813
    %v1852 = vpack.c.b16 %v1814, %v1814
    %v1853 = vpack.c.b16 %v1815, %v1815
    %v1854 = vpack.c.b16 %v1816, %v1816
    %v1855 = vpack.c.b16 %v1817, %v1817
    %1894 = vst [vmem:[#allocation2] sm:$0xf] %v1818
    %1895 = vst [vmem:[#allocation2 + $0x4] sm:$0xf] %v1819
    %1896 = vst [vmem:[#allocation2 + $0x8] sm:$0xf] %v1820
    %1897 = vst [vmem:[#allocation2 + $0xc] sm:$0xf] %v1821
    %1898 = vst [vmem:[#allocation2 + $0x10] sm:$0xf] %v1822
    %1899 = vst [vmem:[#allocation2 + $0x14] sm:$0xf] %v1823
    %1900 = vst [vmem:[#allocation2 + $0x18] sm:$0xf] %v1824
    %1901 = vst [vmem:[#allocation2 + $0x1c] sm:$0xf] %v1825
    %1902 = vst [vmem:[#allocation2 + $0x20] sm:$0xf] %v1826
    %1903 = vst [vmem:[#allocation2 + $0x24] sm:$0xf] %v1827
    %1904 = vst [vmem:[#allocation2 + $0x28] sm:$0xf] %v1828
    %1905 = vst [vmem:[#allocation2 + $0x2c] sm:$0xf] %v1829
    %1906 = vst [vmem:[#allocation2 + $0x30] sm:$0xf] %v1830
    %1907 = vst [vmem:[#allocation2 + $0x34] sm:$0xf] %v1831
    %1908 = vst [vmem:[#allocation2 + $0x38] sm:$0xf] %v1832
    %1909 = vst [vmem:[#allocation2 + $0x3c] sm:$0xf] %v1833
    %1910 = vst [vmem:[#allocation2 + $0x40] sm:$0xf] %v1834
    %1911 = vst [vmem:[#allocation2 + $0x44] sm:$0xf] %v1835
    %1912 = vst [vmem:[#allocation2 + $0x48] sm:$0xf] %v1836
    %1913 = vst [vmem:[#allocation2 + $0x4c] sm:$0xf] %v1837
    %1914 = vst [vmem:[#allocation2 + $0x50] sm:$0xf] %v1838
    %1915 = vst [vmem:[#allocation2 + $0x54] sm:$0xf] %v1839
    %1916 = vst [vmem:[#allocation2 + $0x58] sm:$0xf] %v1840
    %1917 = vst [vmem:[#allocation2 + $0x5c] sm:$0xf] %v1841
    %1918 = vst [vmem:[#allocation2 + $0x60] sm:$0xf] %v1842
    %1919 = vst [vmem:[#allocation2 + $0x64] sm:$0xf] %v1843
    %1920 = vst [vmem:[#allocation2 + $0x68] sm:$0xf] %v1844
    %1921 = vst [vmem:[#allocation2 + $0x6c] sm:$0xf] %v1845
    %1922 = vst [vmem:[#allocation2 + $0x70] sm:$0xf] %v1846
    %1923 = vst [vmem:[#allocation2 + $0x74] sm:$0xf] %v1847
    %1924 = vst [vmem:[#allocation2 + $0x78] sm:$0xf] %v1848
    %1925 = vst [vmem:[#allocation2 + $0x7c] sm:$0xf] %v1849
    %1926 = vst [vmem:[#allocation2 + $0x80] sm:$0xf] %v1850
    %1927 = vst [vmem:[#allocation2 + $0x84] sm:$0xf] %v1851
    %1928 = vst [vmem:[#allocation2 + $0x88] sm:$0xf] %v1852
    %1929 = vst [vmem:[#allocation2 + $0x8c] sm:$0xf] %v1853
    %1930 = vst [vmem:[#allocation2 + $0x90] sm:$0xf] %v1854
    %1931 = vst [vmem:[#allocation2 + $0x94] sm:$0xf] %v1855
    // Predicated region
    $region38: #{tpu_custom_call.1} parent=1 // pred_check
      _
    $region39: #{tpu_custom_call.1} parent=1 // pred_check_branch
      %1933 = sbr.rel (0) target = $region41
    $region40: #{tpu_custom_call.1} parent=1 // pred_region
      %s1935 = ssub.s32 2432, 2432
      %1936 = vsyncadd [#allocation3], %s1935
      %s1937 = sshll.u32 [#allocation2], 4
      %s1938 = int_to_ptr.vmem [resolvable:$true] %s1937
      %1943 = dma.vmem_to_hbm [thread:$0]  %s1938, 2432, %s9, [#allocation3], 64, 64, 4
    $region41: #{tpu_custom_call.1} parent=1 // pred_fallthru
      _
    // Predicated region
    $region42: #{tpu_custom_call.1} parent=1 // pred_check
      _
    $region43: #{tpu_custom_call.1} parent=1 // pred_check_branch
      %1945 = sbr.rel (0) target = $region45
    $region44: #{tpu_custom_call.1} parent=1 // pred_region
      %1946 = dma.done [#allocation3], 2432
    $region45: #{tpu_custom_call.1} parent=1 // pred_fallthru
      _
    %1947 = vsyncpa [#allocation3], 1

</llo_original>
